<compile_context>
chip_gen: v5e
topology: v5e:2x2
jax: 0.10.0
libtpu: 0.0.40
codegen_flags: <defaults>
</compile_context>

<pallas_src>
import functools

import jax
import jax.numpy as jnp
from jax.experimental import pallas as pl
from jax.experimental.pallas import tpu as pltpu

EPS = 1e-5
STAT_ROWS = 8                      # sublane-aligned rows for per-image stat partials
_VMEM_LIMIT = 32 * 1024 * 1024     # safe scoped-VMEM limit on v5e/v6e/v7x


def _cparams():
    return pltpu.CompilerParams(dimension_semantics=("parallel",),
                                vmem_limit_bytes=_VMEM_LIMIT)


# ------------------------------ kernel helpers --------------------------------

def _accum_conv3x3(get_tap, w_ref, cout):
    # One 3x3 convolution as nine accumulated MXU matmuls; taps live in VMEM.
    acc = None
    for dy in range(3):
        for dx in range(3):
            d = jnp.dot(get_tap(dy, dx), w_ref[dy * 3 + dx],
                        preferred_element_type=jnp.float32)
            acc = d if acc is None else acc + d
    return acc


def _store_stats(stat_ref, vec_1xc):
    # Per-image partial statistic, replicated across STAT_ROWS sublanes so the
    # output block keeps a layout-friendly (8, C) shape ("parallel"-safe).
    stat_ref[0] = jnp.broadcast_to(vec_1xc, (STAT_ROWS, vec_1xc.shape[-1]))


# ------------------------------ Pallas kernels --------------------------------

def conv1_kernel(xph_ref, w1_ref, *rest, stride, ho, wo, cin, cout, proj):
    # Pass A: conv1 (3x3, stride) with in-VMEM im2col + BN1 partial stats;
    # if a projection shortcut exists, also its BN partial stats (values are
    # recomputed in pass C -- cheaper than an (R, Cout) HBM round trip).
    if proj:
        ws_ref, raw1_ref, s1_ref, q1_ref, ss_ref, qs_ref = rest
    else:
        raw1_ref, s1_ref, q1_ref = rest
    rows = ho * wo

    def tap(dy, dx):
        p = (dy % stride) * stride + (dx % stride)
        r0, c0 = dy // stride, dx // stride
        return xph_ref[p, r0:r0 + ho, c0:c0 + wo, :].reshape(rows, cin)

    acc = _accum_conv3x3(tap, w1_ref, cout)
    _store_stats(s1_ref, jnp.sum(acc, axis=0, keepdims=True))
    _store_stats(q1_ref, jnp.sum(acc * acc, axis=0, keepdims=True))
    raw1_ref[0] = acc.reshape(ho, wo, cout).astype(raw1_ref.dtype)

    if proj:
        p = (1 % stride) * stride + (1 % stride)
        o = 1 // stride
        xs = xph_ref[p, o:o + ho, o:o + wo, :].reshape(rows, cin)
        sc = jnp.dot(xs, ws_ref[...], preferred_element_type=jnp.float32)
        _store_stats(ss_ref, jnp.sum(sc, axis=0, keepdims=True))
        _store_stats(qs_ref, jnp.sum(sc * sc, axis=0, keepdims=True))


def conv2_kernel(raw1_ref, sc1_ref, b1_ref, w2_ref,
                 raw2_ref, s2_ref, q2_ref, ypad, *, ho, wo, cout):
    # Pass B: BN1+ReLU (precomputed scale/bias) fused with conv2 (3x3, stride 1)
    # + BN2 partial stats.  The padded conv2 input lives only in VMEM scratch.
    rows = ho * wo
    ypad[...] = jnp.zeros_like(ypad)           # zero every step: megacore-safe
    y1 = jnp.maximum(
        raw1_ref[0].astype(jnp.float32) * sc1_ref[...] + b1_ref[...], 0.0)
    ypad[1:ho + 1, 1:wo + 1, :] = y1.astype(ypad.dtype)

    def tap(dy, dx):
        return ypad[dy:dy + ho, dx:dx + wo, :].reshape(rows, cout)

    acc = _accum_conv3x3(tap, w2_ref, cout)
    _store_stats(s2_ref, jnp.sum(acc, axis=0, keepdims=True))
    _store_stats(q2_ref, jnp.sum(acc * acc, axis=0, keepdims=True))
    raw2_ref[0] = acc.reshape(ho, wo, cout).astype(raw2_ref.dtype)


def final_proj_kernel(raw2_ref, sc2_ref, b2_ref, xph_ref, ws_ref, scs_ref, bs_ref,
                      out_ref, *, stride, ho, wo, cin, cout):
    # Pass C (projection): BN2+ReLU, recompute 1x1 shortcut, BNs+ReLU, add, ReLU.
    rows = ho * wo
    res = jnp.maximum(
        raw2_ref[0].astype(jnp.float32) * sc2_ref[...] + b2_ref[...], 0.0)
    o = 1 // stride
    xs = xph_ref[0, o:o + ho, o:o + wo, :].reshape(rows, cin)
    sc = jnp.dot(xs, ws_ref[...], preferred_element_type=jnp.float32)
    sc = jnp.maximum(sc * scs_ref[...] + bs_ref[...], 0.0)
    out_ref[0] = jnp.maximum(res + sc.reshape(ho, wo, cout), 0.0).astype(out_ref.dtype)


def final_id_kernel(raw2_ref, sc2_ref, b2_ref, xph_ref, out_ref, *, ho, wo, cout):
    # Pass C (identity shortcut).
    res = jnp.maximum(
        raw2_ref[0].astype(jnp.float32) * sc2_ref[...] + b2_ref[...], 0.0)
    x_id = xph_ref[0, 1:ho + 1, 1:wo + 1, :].astype(jnp.float32)
    out_ref[0] = jnp.maximum(res + x_id, 0.0).astype(out_ref.dtype)


# --------------------------------- JAX glue -----------------------------------

def _phase_split(xp, stride):
    # (N, Hp, Wp, C) spatially padded input -> (N*stride^2, Hph, Wph, C) phase
    # planes.  Each input byte is read exactly once (cheap one-shot reshuffle);
    # stride-s conv taps become plain static slices of a phase plane.
    n, hp, wp, c = xp.shape
    if stride == 1:
        return xp
    hph = -(-hp // stride)
    wph = -(-wp // stride)
    xp = jnp.pad(xp, ((0, 0), (0, hph * stride - hp), (0, wph * stride - wp), (0, 0)))
    xp = xp.reshape(n, hph, stride, wph, stride, c)
    xp = jnp.transpose(xp, (0, 2, 4, 1, 3, 5))
    return xp.reshape(n * stride * stride, hph, wph, c)


def _bn_scale_bias(sum_part, sq_part, gamma, beta, count):
    # Tree-reduce per-image partials (f32) and fold BN into per-channel
    # scale/bias (biased batch variance, clamped against E[x^2]-E[x]^2
    # cancellation).  Tiny (1, C) XLA work.
    s = jnp.sum(sum_part[:, 0, :], axis=0)
    q = jnp.sum(sq_part[:, 0, :], axis=0)
    m = s / count
    v = jnp.maximum(q / count - m * m, 0.0)
    scale = jax.lax.rsqrt(v + EPS) * gamma.reshape(-1)
    bias = beta.reshape(-1) - m * scale
    return scale.reshape(1, -1), bias.reshape(1, -1)


def basic_block_forward(x_nchw, params, stride):
    x = jnp.transpose(x_nchw, (0, 2, 3, 1)).astype(jnp.float32)    # NCHW -> NHWC
    n, h, w, cin = x.shape
    cout = params["w1"].shape[-1]
    ho = (h - 1) // stride + 1
    wo = (w - 1) // stride + 1
    count = float(n * ho * wo)
    needs_proj = (stride != 1) or (cin != cout)
    s2 = stride * stride

    # Matmul inputs are bf16 (documented precision choice), accumulation f32.
    xp = jnp.pad(x, ((0, 0), (1, 1), (1, 1), (0, 0)))
    xph = _phase_split(xp, stride).astype(jnp.bfloat16)            # (n*s2, Hph, Wph, cin)
    hph, wph = xph.shape[1], xph.shape[2]

    w1 = params["w1"].reshape(9, cin, cout).astype(jnp.bfloat16)
    w2 = params["w2"].reshape(9, cout, cout).astype(jnp.bfloat16)

    # Common specs (one grid step per image).
    xph_spec = pl.BlockSpec((s2, hph, wph, cin), lambda i: (i, 0, 0, 0))
    raw_spec = pl.BlockSpec((1, ho, wo, cout), lambda i: (i, 0, 0, 0))
    stat_spec = pl.BlockSpec((1, STAT_ROWS, cout), lambda i: (i, 0, 0))
    sb_spec = pl.BlockSpec((1, cout), lambda i: (0, 0))
    w1_spec = pl.BlockSpec((9, cin, cout), lambda i: (0, 0, 0))
    w2_spec = pl.BlockSpec((9, cout, cout), lambda i: (0, 0, 0))

    raw_shape = jax.ShapeDtypeStruct((n, ho, wo, cout), jnp.bfloat16)
    stat_shape = jax.ShapeDtypeStruct((n, STAT_ROWS, cout), jnp.float32)

    # -------- pass A: conv1 (+ shortcut stats) --------
    kern_a = functools.partial(conv1_kernel, stride=stride, ho=ho, wo=wo,
                               cin=cin, cout=cout, proj=needs_proj)
    if needs_proj:
        ws = params["ws"].reshape(cin, cout).astype(jnp.bfloat16)
        ws_spec = pl.BlockSpec((cin, cout), lambda i: (0, 0))
        raw1, s1p, q1p, ssp, qsp = pl.pallas_call(
            kern_a, grid=(n,),
            in_specs=[xph_spec, w1_spec, ws_spec],
            out_specs=[raw_spec] + [stat_spec] * 4,
            out_shape=[raw_shape] + [stat_shape] * 4,
            compiler_params=_cparams(),
        )(xph, w1, ws)
    else:
        raw1, s1p, q1p = pl.pallas_call(
            kern_a, grid=(n,),
            in_specs=[xph_spec, w1_spec],
            out_specs=[raw_spec] + [stat_spec] * 2,
            out_shape=[raw_shape] + [stat_shape] * 2,
            compiler_params=_cparams(),
        )(xph, w1)

    scale1, bias1 = _bn_scale_bias(s1p, q1p, params["g1"], params["b1"], count)

    # -------- pass B: BN1+ReLU fused into conv2 --------
    kern_b = functools.partial(conv2_kernel, ho=ho, wo=wo, cout=cout)
    raw2, s2p, q2p = pl.pallas_call(
        kern_b, grid=(n,),
        in_specs=[raw_spec, sb_spec, sb_spec, w2_spec],
        out_specs=[raw_spec] + [stat_spec] * 2,
        out_shape=[raw_shape] + [stat_shape] * 2,
        scratch_shapes=[pltpu.VMEM((ho + 2, wo + 2, cout), jnp.bfloat16)],
        compiler_params=_cparams(),
    )(raw1, scale1, bias1, w2)

    scale2, bias2 = _bn_scale_bias(s2p, q2p, params["g2"], params["b2"], count)

    # -------- pass C: BN2+ReLU, shortcut, add, final ReLU --------
    out_shape = jax.ShapeDtypeStruct((n, ho, wo, cout), jnp.float32)
    out_spec = pl.BlockSpec((1, ho, wo, cout), lambda i: (i, 0, 0, 0))
    if needs_proj:
        scale_s, bias_s = _bn_scale_bias(ssp, qsp, params["gs"], params["bs"], count)
        phase_idx = (1 % stride) * stride + (1 % stride)
        xph_sc_spec = pl.BlockSpec((1, hph, wph, cin),
                                   lambda i: (i * s2 + phase_idx, 0, 0, 0))
        kern_c = functools.partial(final_proj_kernel, stride=stride, ho=ho, wo=wo,
                                   cin=cin, cout=cout)
        out = pl.pallas_call(
            kern_c, grid=(n,),
            in_specs=[raw_spec, sb_spec, sb_spec, xph_sc_spec, ws_spec,
                      sb_spec, sb_spec],
            out_specs=out_spec,
            out_shape=out_shape,
            compiler_params=_cparams(),
        )(raw2, scale2, bias2, xph, ws, scale_s, bias_s)
    else:
        kern_c = functools.partial(final_id_kernel, ho=ho, wo=wo, cout=cout)
        out = pl.pallas_call(
            kern_c, grid=(n,),
            in_specs=[raw_spec, sb_spec, sb_spec, xph_spec],
            out_specs=out_spec,
            out_shape=out_shape,
            compiler_params=_cparams(),
        )(raw2, scale2, bias2, xph)

    return jnp.transpose(out, (0, 3, 1, 2))                        # back to NCHW


# ------------------------- reference (pure JAX/XLA) ---------------------------

def reference_forward(x_nchw, params, stride):
    x = jnp.transpose(x_nchw, (0, 2, 3, 1)).astype(jnp.float32)
    cin = x.shape[-1]
    cout = params["w1"].shape[-1]

    def conv(inp, wgt, s, pad):
        return jax.lax.conv_general_dilated(
            inp, wgt, (s, s), pad, dimension_numbers=("NHWC", "HWIO", "NHWC"))

    def bn(inp, g, b):
        m = inp.mean(axis=(0, 1, 2), keepdims=True)
        v = ((inp - m) ** 2).mean(axis=(0, 1, 2), keepdims=True)
        return (inp - m) * jax.lax.rsqrt(v + EPS) * g.reshape(1, 1, 1, -1) \
            + b.reshape(1, 1, 1, -1)

    y = jax.nn.relu(bn(conv(x, params["w1"], stride, ((1, 1), (1, 1))),
                       params["g1"], params["b1"]))
    y = jax.nn.relu(bn(conv(y, params["w2"], 1, ((1, 1), (1, 1))),
                       params["g2"], params["b2"]))
    if stride != 1 or cin != cout:
        s = conv(x, params["ws"], stride, ((0, 0), (0, 0)))
        s = jax.nn.relu(bn(s, params["gs"], params["bs"]))
    else:
        s = x
    return jnp.transpose(jax.nn.relu(y + s), (0, 3, 1, 2))


def init_params(key, cin, cout):
    k1, k2, k3 = jax.random.split(key, 3)
    w1 = jax.random.normal(k1, (3, 3, cin, cout), jnp.float32) * (2.0 / (9 * cin)) ** 0.5
    w2 = jax.random.normal(k2, (3, 3, cout, cout), jnp.float32) * (2.0 / (9 * cout)) ** 0.5
    ws = jax.random.normal(k3, (1, 1, cin, cout), jnp.float32) * (2.0 / cin) ** 0.5
    ones = jnp.ones((1, cout), jnp.float32)    # BN gamma (PyTorch default init)
    zeros = jnp.zeros((1, cout), jnp.float32)  # BN beta
    return dict(w1=w1, g1=ones, b1=zeros,
                w2=w2, g2=ones, b2=zeros,
                ws=ws, gs=ones, bs=zeros)


if __name__ == "__main__":
    key = jax.random.PRNGKey(0)
    kx, kp = jax.random.split(key)

    # Case 1: down-sampling block (stride=2, 4 -> 8 channels) -> projection shortcut.
    x = jax.random.normal(kx, (2, 4, 16, 16), jnp.float32)
    params = init_params(kp, 4, 8)
    out = jax.block_until_ready(basic_block_forward(x, params, stride=2))
    ref = reference_forward(x, params, stride=2)
    assert out.shape == (2, 8, 8, 8), out.shape
    err = float(jnp.max(jnp.abs(out - ref)))
    assert err < 1e-1, f"projection-shortcut mismatch, max abs err {err}"

    # Case 2: identity block (stride=1, 8 -> 8 channels) -> exercises the
    # identity shortcut and the cross-image two-pass BatchNorm reduction.
    x2 = jax.random.normal(kx, (2, 8, 16, 16), jnp.float32)
    params2 = init_params(kp, 8, 8)
    out2 = jax.block_until_ready(basic_block_forward(x2, params2, stride=1))
    ref2 = reference_forward(x2, params2, stride=1)
    assert out2.shape == (2, 8, 16, 16), out2.shape
    err2 = float(jnp.max(jnp.abs(out2 - ref2)))
    assert err2 < 1e-1, f"identity-shortcut mismatch, max abs err {err2}"

    print("KERNEL_OK")
</pallas_src>

<mosaic_0001>
module attributes {stable_mosaic.version = 11 : i64} {
  func.func @conv1_kernel(%arg0: i32, %arg1: memref<4x9x9x4xbf16, #tpu.memory_space<vmem>>, %arg2: memref<9x4x8xbf16, #tpu.memory_space<vmem>>, %arg3: memref<4x8xbf16, #tpu.memory_space<vmem>>, %arg4: memref<1x8x8x8xbf16, #tpu.memory_space<vmem>>, %arg5: memref<1x8x8xf32, #tpu.memory_space<vmem>>, %arg6: memref<1x8x8xf32, #tpu.memory_space<vmem>>, %arg7: memref<1x8x8xf32, #tpu.memory_space<vmem>>, %arg8: memref<1x8x8xf32, #tpu.memory_space<vmem>>) attributes {dimension_semantics = [#tpu.dimension_semantics<parallel>], iteration_bounds = array<i64: 2>, scalar_prefetch = 0 : i64, scratch_operands = 0 : i64, tpu.core_type = #tpu.core_type<tc>, window_params = [{transform_indices = @transform_0, window_bounds = array<i64: 4, 9, 9, 4>}, {pipeline_mode = #tpu.pipeline_mode<synchronous>, transform_indices = @transform_1, window_bounds = array<i64: 9, 4, 8>}, {pipeline_mode = #tpu.pipeline_mode<synchronous>, transform_indices = @transform_2, window_bounds = array<i64: 4, 8>}, {transform_indices = @transform_3, window_bounds = array<i64: 1, 8, 8, 8>}, {transform_indices = @transform_4, window_bounds = array<i64: 1, 8, 8>}, {transform_indices = @transform_5, window_bounds = array<i64: 1, 8, 8>}, {transform_indices = @transform_6, window_bounds = array<i64: 1, 8, 8>}, {transform_indices = @transform_7, window_bounds = array<i64: 1, 8, 8>}]} {
    %c0 = arith.constant 0 : index
    %c0_0 = arith.constant 0 : index
    %c0_1 = arith.constant 0 : index
    %c0_2 = arith.constant 0 : index
    %0 = vector.load %arg1[%c0, %c0_0, %c0_1, %c0_2] : memref<4x9x9x4xbf16, #tpu.memory_space<vmem>>, vector<1x8x8x4xbf16>
    %1 = vector.shape_cast %0 : vector<1x8x8x4xbf16> to vector<8x8x4xbf16>
    %2 = vector.shape_cast %1 : vector<8x8x4xbf16> to vector<64x4xbf16>
    %c0_3 = arith.constant 0 : index
    %c0_4 = arith.constant 0 : index
    %c0_5 = arith.constant 0 : index
    %3 = vector.load %arg2[%c0_3, %c0_4, %c0_5] : memref<9x4x8xbf16, #tpu.memory_space<vmem>>, vector<1x4x8xbf16>
    %4 = vector.shape_cast %3 : vector<1x4x8xbf16> to vector<4x8xbf16>
    %cst = arith.constant dense<0.000000e+00> : vector<64x8xf32>
    %5 = tpu.matmul %2, %4, %cst {dimension_numbers = #tpu.dot_dimension_numbers<[1], [0], [0], [1], [0, 0, 1, 1], [], []>} : vector<64x4xbf16>, vector<4x8xbf16>, vector<64x8xf32> -> vector<64x8xf32>
    %c1 = arith.constant 1 : index
    %c0_6 = arith.constant 0 : index
    %c0_7 = arith.constant 0 : index
    %c0_8 = arith.constant 0 : index
    %6 = vector.load %arg1[%c1, %c0_6, %c0_7, %c0_8] : memref<4x9x9x4xbf16, #tpu.memory_space<vmem>>, vector<1x8x8x4xbf16>
    %7 = vector.shape_cast %6 : vector<1x8x8x4xbf16> to vector<8x8x4xbf16>
    %8 = vector.shape_cast %7 : vector<8x8x4xbf16> to vector<64x4xbf16>
    %c1_9 = arith.constant 1 : index
    %c0_10 = arith.constant 0 : index
    %c0_11 = arith.constant 0 : index
    %9 = vector.load %arg2[%c1_9, %c0_10, %c0_11] : memref<9x4x8xbf16, #tpu.memory_space<vmem>>, vector<1x4x8xbf16>
    %10 = vector.shape_cast %9 : vector<1x4x8xbf16> to vector<4x8xbf16>
    %cst_12 = arith.constant dense<0.000000e+00> : vector<64x8xf32>
    %11 = tpu.matmul %8, %10, %cst_12 {dimension_numbers = #tpu.dot_dimension_numbers<[1], [0], [0], [1], [0, 0, 1, 1], [], []>} : vector<64x4xbf16>, vector<4x8xbf16>, vector<64x8xf32> -> vector<64x8xf32>
    %12 = arith.addf %5, %11 : vector<64x8xf32>
    %c0_13 = arith.constant 0 : index
    %c0_14 = arith.constant 0 : index
    %c1_15 = arith.constant 1 : index
    %c0_16 = arith.constant 0 : index
    %13 = vector.load %arg1[%c0_13, %c0_14, %c1_15, %c0_16] : memref<4x9x9x4xbf16, #tpu.memory_space<vmem>>, vector<1x8x8x4xbf16>
    %14 = vector.shape_cast %13 : vector<1x8x8x4xbf16> to vector<8x8x4xbf16>
    %15 = vector.shape_cast %14 : vector<8x8x4xbf16> to vector<64x4xbf16>
    %c2 = arith.constant 2 : index
    %c0_17 = arith.constant 0 : index
    %c0_18 = arith.constant 0 : index
    %16 = vector.load %arg2[%c2, %c0_17, %c0_18] : memref<9x4x8xbf16, #tpu.memory_space<vmem>>, vector<1x4x8xbf16>
    %17 = vector.shape_cast %16 : vector<1x4x8xbf16> to vector<4x8xbf16>
    %cst_19 = arith.constant dense<0.000000e+00> : vector<64x8xf32>
    %18 = tpu.matmul %15, %17, %cst_19 {dimension_numbers = #tpu.dot_dimension_numbers<[1], [0], [0], [1], [0, 0, 1, 1], [], []>} : vector<64x4xbf16>, vector<4x8xbf16>, vector<64x8xf32> -> vector<64x8xf32>
    %19 = arith.addf %12, %18 : vector<64x8xf32>
    %c2_20 = arith.constant 2 : index
    %c0_21 = arith.constant 0 : index
    %c0_22 = arith.constant 0 : index
    %c0_23 = arith.constant 0 : index
    %20 = vector.load %arg1[%c2_20, %c0_21, %c0_22, %c0_23] : memref<4x9x9x4xbf16, #tpu.memory_space<vmem>>, vector<1x8x8x4xbf16>
    %21 = vector.shape_cast %20 : vector<1x8x8x4xbf16> to vector<8x8x4xbf16>
    %22 = vector.shape_cast %21 : vector<8x8x4xbf16> to vector<64x4xbf16>
    %c3 = arith.constant 3 : index
    %c0_24 = arith.constant 0 : index
    %c0_25 = arith.constant 0 : index
    %23 = vector.load %arg2[%c3, %c0_24, %c0_25] : memref<9x4x8xbf16, #tpu.memory_space<vmem>>, vector<1x4x8xbf16>
    %24 = vector.shape_cast %23 : vector<1x4x8xbf16> to vector<4x8xbf16>
    %cst_26 = arith.constant dense<0.000000e+00> : vector<64x8xf32>
    %25 = tpu.matmul %22, %24, %cst_26 {dimension_numbers = #tpu.dot_dimension_numbers<[1], [0], [0], [1], [0, 0, 1, 1], [], []>} : vector<64x4xbf16>, vector<4x8xbf16>, vector<64x8xf32> -> vector<64x8xf32>
    %26 = arith.addf %19, %25 : vector<64x8xf32>
    %c3_27 = arith.constant 3 : index
    %c0_28 = arith.constant 0 : index
    %c0_29 = arith.constant 0 : index
    %c0_30 = arith.constant 0 : index
    %27 = vector.load %arg1[%c3_27, %c0_28, %c0_29, %c0_30] : memref<4x9x9x4xbf16, #tpu.memory_space<vmem>>, vector<1x8x8x4xbf16>
    %28 = vector.shape_cast %27 : vector<1x8x8x4xbf16> to vector<8x8x4xbf16>
    %29 = vector.shape_cast %28 : vector<8x8x4xbf16> to vector<64x4xbf16>
    %c4 = arith.constant 4 : index
    %c0_31 = arith.constant 0 : index
    %c0_32 = arith.constant 0 : index
    %30 = vector.load %arg2[%c4, %c0_31, %c0_32] : memref<9x4x8xbf16, #tpu.memory_space<vmem>>, vector<1x4x8xbf16>
    %31 = vector.shape_cast %30 : vector<1x4x8xbf16> to vector<4x8xbf16>
    %cst_33 = arith.constant dense<0.000000e+00> : vector<64x8xf32>
    %32 = tpu.matmul %29, %31, %cst_33 {dimension_numbers = #tpu.dot_dimension_numbers<[1], [0], [0], [1], [0, 0, 1, 1], [], []>} : vector<64x4xbf16>, vector<4x8xbf16>, vector<64x8xf32> -> vector<64x8xf32>
    %33 = arith.addf %26, %32 : vector<64x8xf32>
    %c2_34 = arith.constant 2 : index
    %c0_35 = arith.constant 0 : index
    %c1_36 = arith.constant 1 : index
    %c0_37 = arith.constant 0 : index
    %34 = vector.load %arg1[%c2_34, %c0_35, %c1_36, %c0_37] : memref<4x9x9x4xbf16, #tpu.memory_space<vmem>>, vector<1x8x8x4xbf16>
    %35 = vector.shape_cast %34 : vector<1x8x8x4xbf16> to vector<8x8x4xbf16>
    %36 = vector.shape_cast %35 : vector<8x8x4xbf16> to vector<64x4xbf16>
    %c5 = arith.constant 5 : index
    %c0_38 = arith.constant 0 : index
    %c0_39 = arith.constant 0 : index
    %37 = vector.load %arg2[%c5, %c0_38, %c0_39] : memref<9x4x8xbf16, #tpu.memory_space<vmem>>, vector<1x4x8xbf16>
    %38 = vector.shape_cast %37 : vector<1x4x8xbf16> to vector<4x8xbf16>
    %cst_40 = arith.constant dense<0.000000e+00> : vector<64x8xf32>
    %39 = tpu.matmul %36, %38, %cst_40 {dimension_numbers = #tpu.dot_dimension_numbers<[1], [0], [0], [1], [0, 0, 1, 1], [], []>} : vector<64x4xbf16>, vector<4x8xbf16>, vector<64x8xf32> -> vector<64x8xf32>
    %40 = arith.addf %33, %39 : vector<64x8xf32>
    %c0_41 = arith.constant 0 : index
    %c1_42 = arith.constant 1 : index
    %c0_43 = arith.constant 0 : index
    %c0_44 = arith.constant 0 : index
    %41 = vector.load %arg1[%c0_41, %c1_42, %c0_43, %c0_44] : memref<4x9x9x4xbf16, #tpu.memory_space<vmem>>, vector<1x8x8x4xbf16>
    %42 = vector.shape_cast %41 : vector<1x8x8x4xbf16> to vector<8x8x4xbf16>
    %43 = vector.shape_cast %42 : vector<8x8x4xbf16> to vector<64x4xbf16>
    %c6 = arith.constant 6 : index
    %c0_45 = arith.constant 0 : index
    %c0_46 = arith.constant 0 : index
    %44 = vector.load %arg2[%c6, %c0_45, %c0_46] : memref<9x4x8xbf16, #tpu.memory_space<vmem>>, vector<1x4x8xbf16>
    %45 = vector.shape_cast %44 : vector<1x4x8xbf16> to vector<4x8xbf16>
    %cst_47 = arith.constant dense<0.000000e+00> : vector<64x8xf32>
    %46 = tpu.matmul %43, %45, %cst_47 {dimension_numbers = #tpu.dot_dimension_numbers<[1], [0], [0], [1], [0, 0, 1, 1], [], []>} : vector<64x4xbf16>, vector<4x8xbf16>, vector<64x8xf32> -> vector<64x8xf32>
    %47 = arith.addf %40, %46 : vector<64x8xf32>
    %c1_48 = arith.constant 1 : index
    %c1_49 = arith.constant 1 : index
    %c0_50 = arith.constant 0 : index
    %c0_51 = arith.constant 0 : index
    %48 = vector.load %arg1[%c1_48, %c1_49, %c0_50, %c0_51] : memref<4x9x9x4xbf16, #tpu.memory_space<vmem>>, vector<1x8x8x4xbf16>
    %49 = vector.shape_cast %48 : vector<1x8x8x4xbf16> to vector<8x8x4xbf16>
    %50 = vector.shape_cast %49 : vector<8x8x4xbf16> to vector<64x4xbf16>
    %c7 = arith.constant 7 : index
    %c0_52 = arith.constant 0 : index
    %c0_53 = arith.constant 0 : index
    %51 = vector.load %arg2[%c7, %c0_52, %c0_53] : memref<9x4x8xbf16, #tpu.memory_space<vmem>>, vector<1x4x8xbf16>
    %52 = vector.shape_cast %51 : vector<1x4x8xbf16> to vector<4x8xbf16>
    %cst_54 = arith.constant dense<0.000000e+00> : vector<64x8xf32>
    %53 = tpu.matmul %50, %52, %cst_54 {dimension_numbers = #tpu.dot_dimension_numbers<[1], [0], [0], [1], [0, 0, 1, 1], [], []>} : vector<64x4xbf16>, vector<4x8xbf16>, vector<64x8xf32> -> vector<64x8xf32>
    %54 = arith.addf %47, %53 : vector<64x8xf32>
    %c0_55 = arith.constant 0 : index
    %c1_56 = arith.constant 1 : index
    %c1_57 = arith.constant 1 : index
    %c0_58 = arith.constant 0 : index
    %55 = vector.load %arg1[%c0_55, %c1_56, %c1_57, %c0_58] : memref<4x9x9x4xbf16, #tpu.memory_space<vmem>>, vector<1x8x8x4xbf16>
    %56 = vector.shape_cast %55 : vector<1x8x8x4xbf16> to vector<8x8x4xbf16>
    %57 = vector.shape_cast %56 : vector<8x8x4xbf16> to vector<64x4xbf16>
    %c8 = arith.constant 8 : index
    %c0_59 = arith.constant 0 : index
    %c0_60 = arith.constant 0 : index
    %58 = vector.load %arg2[%c8, %c0_59, %c0_60] : memref<9x4x8xbf16, #tpu.memory_space<vmem>>, vector<1x4x8xbf16>
    %59 = vector.shape_cast %58 : vector<1x4x8xbf16> to vector<4x8xbf16>
    %cst_61 = arith.constant dense<0.000000e+00> : vector<64x8xf32>
    %60 = tpu.matmul %57, %59, %cst_61 {dimension_numbers = #tpu.dot_dimension_numbers<[1], [0], [0], [1], [0, 0, 1, 1], [], []>} : vector<64x4xbf16>, vector<4x8xbf16>, vector<64x8xf32> -> vector<64x8xf32>
    %61 = arith.addf %54, %60 : vector<64x8xf32>
    %cst_62 = arith.constant dense<0.000000e+00> : vector<8xf32>
    %62 = vector.multi_reduction <add>, %61, %cst_62 [0] : vector<64x8xf32> to vector<8xf32>
    %63 = vector.shape_cast %62 : vector<8xf32> to vector<1x8xf32>
    %64 = vector.shape_cast %63 : vector<1x8xf32> to vector<1x8xf32>
    %65 = vector.broadcast %64 : vector<1x8xf32> to vector<8x8xf32>
    %c0_63 = arith.constant 0 : index
    %c0_64 = arith.constant 0 : index
    %c0_65 = arith.constant 0 : index
    %66 = vector.load %arg5[%c0_63, %c0_64, %c0_65] : memref<1x8x8xf32, #tpu.memory_space<vmem>>, vector<1x8x8xf32>
    %67 = vector.shape_cast %66 : vector<1x8x8xf32> to vector<8x8xf32>
    %68 = vector.shape_cast %65 : vector<8x8xf32> to vector<1x8x8xf32>
    tpu.vector_store %arg5[%c0_63, %c0_64, %c0_65], %68 {strides = array<i32>} : memref<1x8x8xf32, #tpu.memory_space<vmem>>, vector<1x8x8xf32>,
    %69 = arith.mulf %61, %61 : vector<64x8xf32>
    %cst_66 = arith.constant dense<0.000000e+00> : vector<8xf32>
    %70 = vector.multi_reduction <add>, %69, %cst_66 [0] : vector<64x8xf32> to vector<8xf32>
    %71 = vector.shape_cast %70 : vector<8xf32> to vector<1x8xf32>
    %72 = vector.shape_cast %71 : vector<1x8xf32> to vector<1x8xf32>
    %73 = vector.broadcast %72 : vector<1x8xf32> to vector<8x8xf32>
    %c0_67 = arith.constant 0 : index
    %c0_68 = arith.constant 0 : index
    %c0_69 = arith.constant 0 : index
    %74 = vector.load %arg6[%c0_67, %c0_68, %c0_69] : memref<1x8x8xf32, #tpu.memory_space<vmem>>, vector<1x8x8xf32>
    %75 = vector.shape_cast %74 : vector<1x8x8xf32> to vector<8x8xf32>
    %76 = vector.shape_cast %73 : vector<8x8xf32> to vector<1x8x8xf32>
    tpu.vector_store %arg6[%c0_67, %c0_68, %c0_69], %76 {strides = array<i32>} : memref<1x8x8xf32, #tpu.memory_space<vmem>>, vector<1x8x8xf32>,
    %77 = vector.shape_cast %61 : vector<64x8xf32> to vector<8x8x8xf32>
    %78 = arith.truncf %77 : vector<8x8x8xf32> to vector<8x8x8xbf16>
    %c0_70 = arith.constant 0 : index
    %c0_71 = arith.constant 0 : index
    %c0_72 = arith.constant 0 : index
    %c0_73 = arith.constant 0 : index
    %79 = vector.load %arg4[%c0_70, %c0_71, %c0_72, %c0_73] : memref<1x8x8x8xbf16, #tpu.memory_space<vmem>>, vector<1x8x8x8xbf16>
    %80 = vector.shape_cast %79 : vector<1x8x8x8xbf16> to vector<8x8x8xbf16>
    %81 = vector.shape_cast %78 : vector<8x8x8xbf16> to vector<1x8x8x8xbf16>
    tpu.vector_store %arg4[%c0_70, %c0_71, %c0_72, %c0_73], %81 {strides = array<i32>} : memref<1x8x8x8xbf16, #tpu.memory_space<vmem>>, vector<1x8x8x8xbf16>,
    %c3_74 = arith.constant 3 : index
    %c0_75 = arith.constant 0 : index
    %c0_76 = arith.constant 0 : index
    %c0_77 = arith.constant 0 : index
    %82 = vector.load %arg1[%c3_74, %c0_75, %c0_76, %c0_77] : memref<4x9x9x4xbf16, #tpu.memory_space<vmem>>, vector<1x8x8x4xbf16>
    %83 = vector.shape_cast %82 : vector<1x8x8x4xbf16> to vector<8x8x4xbf16>
    %84 = vector.shape_cast %83 : vector<8x8x4xbf16> to vector<64x4xbf16>
    %c0_78 = arith.constant 0 : index
    %c0_79 = arith.constant 0 : index
    %85 = vector.load %arg3[%c0_78, %c0_79] : memref<4x8xbf16, #tpu.memory_space<vmem>>, vector<4x8xbf16>
    %cst_80 = arith.constant dense<0.000000e+00> : vector<64x8xf32>
    %86 = tpu.matmul %84, %85, %cst_80 {dimension_numbers = #tpu.dot_dimension_numbers<[1], [0], [0], [1], [0, 0, 1, 1], [], []>} : vector<64x4xbf16>, vector<4x8xbf16>, vector<64x8xf32> -> vector<64x8xf32>
    %cst_81 = arith.constant dense<0.000000e+00> : vector<8xf32>
    %87 = vector.multi_reduction <add>, %86, %cst_81 [0] : vector<64x8xf32> to vector<8xf32>
    %88 = vector.shape_cast %87 : vector<8xf32> to vector<1x8xf32>
    %89 = vector.shape_cast %88 : vector<1x8xf32> to vector<1x8xf32>
    %90 = vector.broadcast %89 : vector<1x8xf32> to vector<8x8xf32>
    %c0_82 = arith.constant 0 : index
    %c0_83 = arith.constant 0 : index
    %c0_84 = arith.constant 0 : index
    %91 = vector.load %arg7[%c0_82, %c0_83, %c0_84] : memref<1x8x8xf32, #tpu.memory_space<vmem>>, vector<1x8x8xf32>
    %92 = vector.shape_cast %91 : vector<1x8x8xf32> to vector<8x8xf32>
    %93 = vector.shape_cast %90 : vector<8x8xf32> to vector<1x8x8xf32>
    tpu.vector_store %arg7[%c0_82, %c0_83, %c0_84], %93 {strides = array<i32>} : memref<1x8x8xf32, #tpu.memory_space<vmem>>, vector<1x8x8xf32>,
    %94 = arith.mulf %86, %86 : vector<64x8xf32>
    %cst_85 = arith.constant dense<0.000000e+00> : vector<8xf32>
    %95 = vector.multi_reduction <add>, %94, %cst_85 [0] : vector<64x8xf32> to vector<8xf32>
    %96 = vector.shape_cast %95 : vector<8xf32> to vector<1x8xf32>
    %97 = vector.shape_cast %96 : vector<1x8xf32> to vector<1x8xf32>
    %98 = vector.broadcast %97 : vector<1x8xf32> to vector<8x8xf32>
    %c0_86 = arith.constant 0 : index
    %c0_87 = arith.constant 0 : index
    %c0_88 = arith.constant 0 : index
    %99 = vector.load %arg8[%c0_86, %c0_87, %c0_88] : memref<1x8x8xf32, #tpu.memory_space<vmem>>, vector<1x8x8xf32>
    %100 = vector.shape_cast %99 : vector<1x8x8xf32> to vector<8x8xf32>
    %101 = vector.shape_cast %98 : vector<8x8xf32> to vector<1x8x8xf32>
    tpu.vector_store %arg8[%c0_86, %c0_87, %c0_88], %101 {strides = array<i32>} : memref<1x8x8xf32, #tpu.memory_space<vmem>>, vector<1x8x8xf32>,
    return
  }
  func.func @transform_0(%arg0: i32) -> (i32, i32, i32, i32) {
    %c0_i32 = arith.constant 0 : i32
    %c0_i32_0 = arith.constant 0 : i32
    %c0_i32_1 = arith.constant 0 : i32
    %c0_i32_2 = arith.constant 0 : i32
    return %arg0, %c0_i32, %c0_i32_0, %c0_i32_1 : i32, i32, i32, i32
  }
  func.func @transform_1(%arg0: i32) -> (i32, i32, i32) {
    %c0_i32 = arith.constant 0 : i32
    %c0_i32_0 = arith.constant 0 : i32
    %c0_i32_1 = arith.constant 0 : i32
    %c0_i32_2 = arith.constant 0 : i32
    return %c0_i32, %c0_i32_0, %c0_i32_1 : i32, i32, i32
  }
  func.func @transform_2(%arg0: i32) -> (i32, i32) {
    %c0_i32 = arith.constant 0 : i32
    %c0_i32_0 = arith.constant 0 : i32
    %c0_i32_1 = arith.constant 0 : i32
    return %c0_i32, %c0_i32_0 : i32, i32
  }
  func.func @transform_3(%arg0: i32) -> (i32, i32, i32, i32) {
    %c0_i32 = arith.constant 0 : i32
    %c0_i32_0 = arith.constant 0 : i32
    %c0_i32_1 = arith.constant 0 : i32
    %c0_i32_2 = arith.constant 0 : i32
    return %arg0, %c0_i32, %c0_i32_0, %c0_i32_1 : i32, i32, i32, i32
  }
  func.func @transform_4(%arg0: i32) -> (i32, i32, i32) {
    %c0_i32 = arith.constant 0 : i32
    %c0_i32_0 = arith.constant 0 : i32
    %c0_i32_1 = arith.constant 0 : i32
    return %arg0, %c0_i32, %c0_i32_0 : i32, i32, i32
  }
  func.func @transform_5(%arg0: i32) -> (i32, i32, i32) {
    %c0_i32 = arith.constant 0 : i32
    %c0_i32_0 = arith.constant 0 : i32
    %c0_i32_1 = arith.constant 0 : i32
    return %arg0, %c0_i32, %c0_i32_0 : i32, i32, i32
  }
  func.func @transform_6(%arg0: i32) -> (i32, i32, i32) {
    %c0_i32 = arith.constant 0 : i32
    %c0_i32_0 = arith.constant 0 : i32
    %c0_i32_1 = arith.constant 0 : i32
    return %arg0, %c0_i32, %c0_i32_0 : i32, i32, i32
  }
  func.func @transform_7(%arg0: i32) -> (i32, i32, i32) {
    %c0_i32 = arith.constant 0 : i32
    %c0_i32_0 = arith.constant 0 : i32
    %c0_i32_1 = arith.constant 0 : i32
    return %arg0, %c0_i32, %c0_i32_0 : i32, i32, i32
  }
}

</mosaic_0001>

<llo_original>
// kernel: tpu_custom_call.1
$region0: #{tpu_custom_call.1}
  #allocation0 [shape = 'u32[]', space=smem, size = 0x4, offset = 0x4, fixed_abs, tag = 'smem constant byte address 0x4 - core index']
  #allocation1 [shape = 'u32[72,128]{1,0:T(1,128)}', space=vmem, size = 0x9000, scoped, tag = 'internal scratch']
  %s0 = inlined_call_operand.vmem [shape: bf16[8,9,9,4], index: 0, kind: input, shape index: {}]
  %s1 = inlined_call_operand.vmem [shape: bf16[9,4,8], index: 1, kind: input, shape index: {}]
  %s2 = inlined_call_operand.vmem [shape: bf16[4,8], index: 2, kind: input, shape index: {}]
  %s3 = inlined_call_operand.hbm [shape: bf16[2,8,8,8], index: 3, kind: output, shape index: {0}]
  %s4 = inlined_call_operand.hbm [shape: f32[2,8,8], index: 4, kind: output, shape index: {1}]
  %s5 = inlined_call_operand.hbm [shape: f32[2,8,8], index: 5, kind: output, shape index: {2}]
  %s6 = inlined_call_operand.hbm [shape: f32[2,8,8], index: 6, kind: output, shape index: {3}]
  %s7 = inlined_call_operand.hbm [shape: f32[2,8,8], index: 7, kind: output, shape index: {4}]
  %8 = xla_tuple %s3, %s4, %s5, %s6, %s7
  %s9 = sld [smem:[#allocation0]]
  $region77: #{tpu_custom_call.1} parent=0
    _
  %s11 = ssub.s32 1, %s9
  %s12 = scalar_select 0, %s11, %s9
  $region1: #{tpu_custom_call.1} parent=0
    #allocation2 [shape = 'u8[32768]{0}', space=vmem, size = 0x8000, scoped, tag = 'output window, operand 0']
    #allocation3 [shape = 's32[2]{0}', space=sflag, size = 0x8, scoped, tag = 'scoped memory for tpu_custom_call.1']
    #allocation4 [shape = 'u8[8192]{0}', space=vmem, size = 0x2000, scoped, tag = 'output window, operand 1']
    #allocation5 [shape = 's32[2]{0}', space=sflag, size = 0x8, scoped, tag = 'scoped memory for tpu_custom_call.1']
    #allocation6 [shape = 'u8[8192]{0}', space=vmem, size = 0x2000, scoped, tag = 'output window, operand 2']
    #allocation7 [shape = 'u8[8192]{0}', space=vmem, size = 0x2000, scoped, tag = 'output window, operand 3']
    #allocation8 [shape = 's32[2]{0}', space=sflag, size = 0x8, scoped, tag = 'scoped memory for tpu_custom_call.1']
    #allocation9 [shape = 'u8[8192]{0}', space=vmem, size = 0x2000, scoped, tag = 'output window, operand 4']
    %13 = vsyncpa [#allocation3], 0
    %s14 = scalar_lea.sflag [#allocation3], 1
    %15 = vsyncpa %s14, 0
    %16 = vsyncpa [#allocation5], 0
    %s17 = scalar_lea.sflag [#allocation5], 1
    %18 = vsyncpa %s17, 0
    %19 = vsyncpa [#allocation8], 0
    %s20 = scalar_lea.sflag [#allocation8], 1
    %21 = vsyncpa %s20, 0
    loop: start=0, step=1, limit=4
    $region2: #{tpu_custom_call.1} parent=1 // loop_pre_header
      _
    $region3: #{tpu_custom_call.1} parent=1 // loop_header
      %s23 = sphi 0, %s27
      %p24 = scmp.ge.s32.totalorder %s23, 4
      %s33 = sphi 0, %s35
      %s36 = sphi 0, %s33
      %s37 = sphi 0, %s36
      %s53 = sphi 0, %s37
      %s57 = sphi 0, %s57
      %s59 = sphi 0, %s57
      %s60 = sphi 0, %s59
      %s74 = sphi 0, %s60
      %s78 = sphi 0, %s78
      %s80 = sphi 0, %s78
      %s81 = sphi 0, %s80
      %s95 = sphi 0, %s81
      %s101 = sphi 0, %s103
      %s104 = sphi 0, %s101
      %s105 = sphi 0, %s104
      %s121 = sphi 0, %s105
      %s127 = sphi 0, %s129
      %s130 = sphi 0, %s127
      %s131 = sphi 0, %s130
      %s147 = sphi 0, %s131
      %s153 = sphi 0, %s155
      %s156 = sphi 0, %s153
      %s157 = sphi 0, %s156
      %s173 = sphi 0, %s157
      %s179 = sphi 0, %s181
      %s182 = sphi 0, %s179
      %s183 = sphi 0, %s182
      %s199 = sphi 0, %s183
      %s205 = sphi 0, %s207
      %s208 = sphi 0, %s205
      %s209 = sphi 0, %s208
      %s225 = sphi 0, %s209
    $region4: #{tpu_custom_call.1} parent=1 // loop_header_branch
      %26 = sbr.rel (%p24) target = $region8
    $region5: #{tpu_custom_call.1} parent=1 // loop_body
      %s28 = ssub.s32 %s23, 1
      %s29 = ssub.s32 %s23, 2
      %s30 = sadd.s32 %s23, 1
      %s31 = ssub.s32 %s23, %s30
      %p32 = scmp.eq.s32.totalorder %s31, 0
      %s34 = sadd.s32 %s33, 1
      %s35 = scalar_select %p32, %s33, %s34
      %p38 = pneg %p32
      %p39 = scmp.eq.s32.totalorder %s23, 1
      %p40 = por %p38, %p39
      %p41 = scmp.ne.s32.totalorder %s33, %s36
      %p42 = scmp.eq.s32.totalorder %s23, 0
      %p43 = por %p41, %p42
      %p44 = scmp.ne.s32.totalorder %s33, %s36
      %p45 = scmp.eq.s32.totalorder %s28, 1
      %p46 = por %p44, %p45
      %p47 = scmp.ne.s32.totalorder %s36, %s37
      %p48 = scmp.eq.s32.totalorder %s28, 0
      %p49 = por %p47, %p48
      %p50 = scmp.ne.s32.totalorder %s36, %s37
      %p51 = scmp.eq.s32.totalorder %s29, 1
      %p52 = por %p50, %p51
      %p54 = scmp.ne.s32.totalorder %s37, %s53
      %p55 = scmp.eq.s32.totalorder %s29, 0
      %p56 = por %p54, %p55
      %s58 = sadd.s32 %s57, 1
      %p61 = scmp.eq.s32.totalorder %s23, 1
      %p62 = scmp.ne.s32.totalorder %s57, %s59
      %p63 = scmp.eq.s32.totalorder %s23, 0
      %p64 = por %p62, %p63
      %p65 = scmp.ne.s32.totalorder %s57, %s59
      %p66 = scmp.eq.s32.totalorder %s28, 1
      %p67 = por %p65, %p66
      %p68 = scmp.ne.s32.totalorder %s59, %s60
      %p69 = scmp.eq.s32.totalorder %s28, 0
      %p70 = por %p68, %p69
      %p71 = scmp.ne.s32.totalorder %s59, %s60
      %p72 = scmp.eq.s32.totalorder %s29, 1
      %p73 = por %p71, %p72
      %p75 = scmp.ne.s32.totalorder %s60, %s74
      %p76 = scmp.eq.s32.totalorder %s29, 0
      %p77 = por %p75, %p76
      %s79 = sadd.s32 %s78, 1
      %p82 = scmp.eq.s32.totalorder %s23, 1
      %p83 = scmp.ne.s32.totalorder %s78, %s80
      %p84 = scmp.eq.s32.totalorder %s23, 0
      %p85 = por %p83, %p84
      %p86 = scmp.ne.s32.totalorder %s78, %s80
      %p87 = scmp.eq.s32.totalorder %s28, 1
      %p88 = por %p86, %p87
      %p89 = scmp.ne.s32.totalorder %s80, %s81
      %p90 = scmp.eq.s32.totalorder %s28, 0
      %p91 = por %p89, %p90
      %p92 = scmp.ne.s32.totalorder %s80, %s81
      %p93 = scmp.eq.s32.totalorder %s29, 1
      %p94 = por %p92, %p93
      %p96 = scmp.ne.s32.totalorder %s81, %s95
      %p97 = scmp.eq.s32.totalorder %s29, 0
      %p98 = por %p96, %p97
      %s99 = ssub.s32 %s23, %s30
      %p100 = scmp.eq.s32.totalorder %s99, 0
      %s102 = sadd.s32 %s101, 1
      %s103 = scalar_select %p100, %s101, %s102
      %p106 = pneg %p100
      %p107 = scmp.eq.s32.totalorder %s23, 1
      %p108 = por %p106, %p107
      %p109 = scmp.ne.s32.totalorder %s101, %s104
      %p110 = scmp.eq.s32.totalorder %s23, 0
      %p111 = por %p109, %p110
      %p112 = scmp.ne.s32.totalorder %s101, %s104
      %p113 = scmp.eq.s32.totalorder %s28, 1
      %p114 = por %p112, %p113
      %p115 = scmp.ne.s32.totalorder %s104, %s105
      %p116 = scmp.eq.s32.totalorder %s28, 0
      %p117 = por %p115, %p116
      %p118 = scmp.ne.s32.totalorder %s104, %s105
      %p119 = scmp.eq.s32.totalorder %s29, 1
      %p120 = por %p118, %p119
      %p122 = scmp.ne.s32.totalorder %s105, %s121
      %p123 = scmp.eq.s32.totalorder %s29, 0
      %p124 = por %p122, %p123
      %s125 = ssub.s32 %s23, %s30
      %p126 = scmp.eq.s32.totalorder %s125, 0
      %s128 = sadd.s32 %s127, 1
      %s129 = scalar_select %p126, %s127, %s128
      %p132 = pneg %p126
      %p133 = scmp.eq.s32.totalorder %s23, 1
      %p134 = por %p132, %p133
      %p135 = scmp.ne.s32.totalorder %s127, %s130
      %p136 = scmp.eq.s32.totalorder %s23, 0
      %p137 = por %p135, %p136
      %p138 = scmp.ne.s32.totalorder %s127, %s130
      %p139 = scmp.eq.s32.totalorder %s28, 1
      %p140 = por %p138, %p139
      %p141 = scmp.ne.s32.totalorder %s130, %s131
      %p142 = scmp.eq.s32.totalorder %s28, 0
      %p143 = por %p141, %p142
      %p144 = scmp.ne.s32.totalorder %s130, %s131
      %p145 = scmp.eq.s32.totalorder %s29, 1
      %p146 = por %p144, %p145
      %p148 = scmp.ne.s32.totalorder %s131, %s147
      %p149 = scmp.eq.s32.totalorder %s29, 0
      %p150 = por %p148, %p149
      %s151 = ssub.s32 %s23, %s30
      %p152 = scmp.eq.s32.totalorder %s151, 0
      %s154 = sadd.s32 %s153, 1
      %s155 = scalar_select %p152, %s153, %s154
      %p158 = pneg %p152
      %p159 = scmp.eq.s32.totalorder %s23, 1
      %p160 = por %p158, %p159
      %p161 = scmp.ne.s32.totalorder %s153, %s156
      %p162 = scmp.eq.s32.totalorder %s23, 0
      %p163 = por %p161, %p162
      %p164 = scmp.ne.s32.totalorder %s153, %s156
      %p165 = scmp.eq.s32.totalorder %s28, 1
      %p166 = por %p164, %p165
      %p167 = scmp.ne.s32.totalorder %s156, %s157
      %p168 = scmp.eq.s32.totalorder %s28, 0
      %p169 = por %p167, %p168
      %p170 = scmp.ne.s32.totalorder %s156, %s157
      %p171 = scmp.eq.s32.totalorder %s29, 1
      %p172 = por %p170, %p171
      %p174 = scmp.ne.s32.totalorder %s157, %s173
      %p175 = scmp.eq.s32.totalorder %s29, 0
      %p176 = por %p174, %p175
      %s177 = ssub.s32 %s23, %s30
      %p178 = scmp.eq.s32.totalorder %s177, 0
      %s180 = sadd.s32 %s179, 1
      %s181 = scalar_select %p178, %s179, %s180
      %p184 = pneg %p178
      %p185 = scmp.eq.s32.totalorder %s23, 1
      %p186 = por %p184, %p185
      %p187 = scmp.ne.s32.totalorder %s179, %s182
      %p188 = scmp.eq.s32.totalorder %s23, 0
      %p189 = por %p187, %p188
      %p190 = scmp.ne.s32.totalorder %s179, %s182
      %p191 = scmp.eq.s32.totalorder %s28, 1
      %p192 = por %p190, %p191
      %p193 = scmp.ne.s32.totalorder %s182, %s183
      %p194 = scmp.eq.s32.totalorder %s28, 0
      %p195 = por %p193, %p194
      %p196 = scmp.ne.s32.totalorder %s182, %s183
      %p197 = scmp.eq.s32.totalorder %s29, 1
      %p198 = por %p196, %p197
      %p200 = scmp.ne.s32.totalorder %s183, %s199
      %p201 = scmp.eq.s32.totalorder %s29, 0
      %p202 = por %p200, %p201
      %s203 = ssub.s32 %s23, %s30
      %p204 = scmp.eq.s32.totalorder %s203, 0
      %s206 = sadd.s32 %s205, 1
      %s207 = scalar_select %p204, %s205, %s206
      %p210 = pneg %p204
      %p211 = scmp.eq.s32.totalorder %s23, 1
      %p212 = por %p210, %p211
      %p213 = scmp.ne.s32.totalorder %s205, %s208
      %p214 = scmp.eq.s32.totalorder %s23, 0
      %p215 = por %p213, %p214
      %p216 = scmp.ne.s32.totalorder %s205, %s208
      %p217 = scmp.eq.s32.totalorder %s28, 1
      %p218 = por %p216, %p217
      %p219 = scmp.ne.s32.totalorder %s208, %s209
      %p220 = scmp.eq.s32.totalorder %s28, 0
      %p221 = por %p219, %p220
      %p222 = scmp.ne.s32.totalorder %s208, %s209
      %p223 = scmp.eq.s32.totalorder %s29, 1
      %p224 = por %p222, %p223
      %p226 = scmp.ne.s32.totalorder %s209, %s225
      %p227 = scmp.eq.s32.totalorder %s29, 0
      %p228 = por %p226, %p227
      %p229 = scmp.le.s32.totalorder 1, %s23
      %p230 = scmp.lt.s32.totalorder %s23, 3
      %p231 = pnand %p229, %p230
      %p232 = pneg %p231
      // Predicated region
      $region9: #{tpu_custom_call.1} parent=5 // pred_check
        _
      $region10: #{tpu_custom_call.1} parent=5 // pred_check_branch
        %234 = sbr.rel (%p231) target = $region12
      $region11: #{tpu_custom_call.1} parent=5 // pred_region
        %s235 = ssub.s32 %s23, 1
        // Predicated region
        $region13: #{tpu_custom_call.1} parent=11 // pred_check
          %p236 = pneg %p70
        $region14: #{tpu_custom_call.1} parent=11 // pred_check_branch
          %238 = sbr.rel (%p236) target = $region16
        $region15: #{tpu_custom_call.1} parent=11 // pred_region
          _
        $region16: #{tpu_custom_call.1} parent=11 // pred_fallthru
          _
        // Predicated region
        $region17: #{tpu_custom_call.1} parent=11 // pred_check
          %p239 = pneg %p91
        $region18: #{tpu_custom_call.1} parent=11 // pred_check_branch
          %241 = sbr.rel (%p239) target = $region20
        $region19: #{tpu_custom_call.1} parent=11 // pred_region
          _
        $region20: #{tpu_custom_call.1} parent=11 // pred_fallthru
          _
      $region12: #{tpu_custom_call.1} parent=5 // pred_fallthru
        _
      %p242 = scmp.lt.s32.totalorder %s23, 2
      // Predicated region
      $region21: #{tpu_custom_call.1} parent=5 // pred_check
        %p243 = pneg %p242
      $region22: #{tpu_custom_call.1} parent=5 // pred_check_branch
        %245 = sbr.rel (%p243) target = $region24
      $region23: #{tpu_custom_call.1} parent=5 // pred_region
        // Predicated region
        $region25: #{tpu_custom_call.1} parent=23 // pred_check
          %p246 = pneg %p43
        $region26: #{tpu_custom_call.1} parent=23 // pred_check_branch
          %248 = sbr.rel (%p246) target = $region28
        $region27: #{tpu_custom_call.1} parent=23 // pred_region
          %s249 = smul.u32 4, %s23
          %p250 = scmp.lt.s32.totalorder %s249, 7
          %s251 = scalar_select %p250, %s249, 7
          %s252 = smul.addr %s251, 18
          %s253 = smul.addr %s252, 4
          %s254 = scalar_lea.vmem %s0, %s253
          %s255 = smul.u32 4, %s23
        $region28: #{tpu_custom_call.1} parent=23 // pred_fallthru
          _
      $region24: #{tpu_custom_call.1} parent=5 // pred_fallthru
        _
      %p256 = scmp.le.s32.totalorder 1, %s23
      %p257 = scmp.lt.s32.totalorder %s23, 3
      %p258 = pnand %p256, %p257
      %p259 = pneg %p258
      // Predicated region
      $region29: #{tpu_custom_call.1} parent=5 // pred_check
        _
      $region30: #{tpu_custom_call.1} parent=5 // pred_check_branch
        %261 = sbr.rel (%p258) target = $region32
      $region31: #{tpu_custom_call.1} parent=5 // pred_region
        %s262 = ssub.s32 %s23, 1
        %s263 = smul.u32 4, %s28
        %p264 = scmp.lt.s32.totalorder %s263, 7
        %s265 = scalar_select %p264, %s263, 7
        %s266 = smul.addr %s265, 18
        %s267 = smul.addr %s266, 4
        %s268 = scalar_lea.vmem %s0, %s267
        %p269 = pneg %p49
        %p270 = pneg %p46
        %p271 = pneg %p70
        %p272 = pneg %p67
        %p273 = pneg %p91
        %p274 = pneg %p88
        %p275 = pneg %p117
        %p276 = pneg %p114
        %s277 = sand.u32 %s104, 1
        %s278 = scalar_lea.sflag [#allocation3], %s277
        %s279 = sand.u32 %s104, 1
        %s280 = smul.addr %s279, 32
        %s281 = scalar_lea.vmem [#allocation2], %s280
        %p282 = pneg %p143
        %p283 = pneg %p140
        %s284 = sand.u32 %s28, 1
        %s285 = scalar_lea.sflag [#allocation5], %s284
        %s286 = sand.u32 %s130, 1
        %s287 = smul.addr %s286, 8
        %s288 = scalar_lea.vmem [#allocation4], %s287
        %p289 = pneg %p169
        %p290 = pneg %p166
        %s291 = sand.u32 %s28, 1
        %s292 = scalar_lea.sflag [#allocation5], %s291
        %s293 = sand.u32 %s156, 1
        %s294 = smul.addr %s293, 8
        %s295 = scalar_lea.vmem [#allocation6], %s294
        %p296 = pneg %p195
        %p297 = pneg %p192
        %s298 = sand.u32 %s28, 1
        %s299 = scalar_lea.sflag [#allocation8], %s298
        %s300 = sand.u32 %s182, 1
        %s301 = smul.addr %s300, 8
        %s302 = scalar_lea.vmem [#allocation7], %s301
        %p303 = pneg %p221
        %p304 = pneg %p218
        %s305 = sand.u32 %s28, 1
        %s306 = scalar_lea.sflag [#allocation8], %s305
        %s307 = sand.u32 %s208, 1
        %s308 = smul.addr %s307, 8
        %s309 = scalar_lea.vmem [#allocation9], %s308
        %s310 = smul.u32 4, %s28
        %p311 = scmp.lt.s32.totalorder %s310, 7
        %s312 = scalar_select %p311, %s310, 7
        %s313 = smul.addr %s312, 18
        %s314 = smul.addr %s313, 4
        %s315 = scalar_lea.vmem %s0, %s314
        %s316 = smul.u32 4, %s28
        %v318 = vld [vmem:[%s315] sm:$0xf]
        %v319 = vld [vmem:[%s315 + $0x8] sm:$0xf]
        %v320 = vld [vmem:[%s315 + $0x10] sm:$0xf]
        %v321 = vld [vmem:[%s315 + $0x18] sm:$0xf]
        %v322 = vld [vmem:[%s315 + $0x20] sm:$0xf]
        %v323 = vld [vmem:[%s315 + $0x28] sm:$0xf]
        %v324 = vld [vmem:[%s315 + $0x30] sm:$0xf]
        %v325 = vld [vmem:[%s315 + $0x38] sm:$0xf]
        %v326 = vld [vmem:[%s1] sm:$0x3]
        %s327 = scalar_lea.vmem %s315, 72
        %v328 = vld [vmem:[%s327] sm:$0xf]
        %v329 = vld [vmem:[%s327 + $0x8] sm:$0xf]
        %v330 = vld [vmem:[%s327 + $0x10] sm:$0xf]
        %v331 = vld [vmem:[%s327 + $0x18] sm:$0xf]
        %v332 = vld [vmem:[%s327 + $0x20] sm:$0xf]
        %v333 = vld [vmem:[%s327 + $0x28] sm:$0xf]
        %v334 = vld [vmem:[%s327 + $0x30] sm:$0xf]
        %v335 = vld [vmem:[%s327 + $0x38] sm:$0xf]
        %s336 = scalar_lea.vmem %s1, 2
        %v337 = vld [vmem:[%s336] sm:$0x3]
        %v346 = vunpack.c.l.b16 %v328
        %v347 = vunpack.c.l.b16 %v329
        %v348 = vunpack.c.l.b16 %v330
        %v349 = vunpack.c.l.b16 %v331
        %v350 = vunpack.c.l.b16 %v332
        %v351 = vunpack.c.l.b16 %v333
        %v352 = vunpack.c.l.b16 %v334
        %v353 = vunpack.c.l.b16 %v335
        %v354 = vpack.c.b16 %v347, %v346
        %v355 = vpack.c.b16 %v349, %v348
        %v356 = vpack.c.b16 %v351, %v350
        %v357 = vpack.c.b16 %v353, %v352
        %vm358 = vcmask 31744
        %v360 = vsel %vm358, %v354, 0
        %v363 = vsel %vm358, %v355, 0
        %v366 = vsel %vm358, %v356, 0
        %v369 = vsel %vm358, %v357, 0
        %vm371 = vcmask 1041408
        %v373 = vsel %vm371, %v337, 0
        %375 = vmatpush.bf16.msra.mxu0 0
        %376 = vmatpush.bf16.msra.mxu0 0
        %377 = vmatpush.bf16.msra.mxu0 0
        %378 = vmatpush.bf16.msra.mxu0 0
        %379 = vmatpush.bf16.msra.mxu0 0
        %380 = vmatpush.bf16.msra.mxu0 0
        %381 = vmatpush.bf16.msra.mxu0 0
        %382 = vmatpush.bf16.msra.mxu0 %v373
        %383 = vmatmul.bf16.gmra.mxu0 %v360
        %v384 = vpop.f32.mrf.mxu0
        %v385 = vadd.f32 0.0, %v384
        %v386 = vpop.f32.mrf.mxu0
        %v387 = vadd.f32 0.0, %v386
        %388 = vmatmul.bf16.gmra.mxu0 %v363
        %v389 = vpop.f32.mrf.mxu0
        %v390 = vadd.f32 0.0, %v389
        %v391 = vpop.f32.mrf.mxu0
        %v392 = vadd.f32 0.0, %v391
        %393 = vmatmul.bf16.gmra.mxu0 %v366
        %v394 = vpop.f32.mrf.mxu0
        %v395 = vadd.f32 0.0, %v394
        %v396 = vpop.f32.mrf.mxu0
        %v397 = vadd.f32 0.0, %v396
        %398 = vmatmul.bf16.gmra.mxu0 %v369
        %v399 = vpop.f32.mrf.mxu0
        %v400 = vadd.f32 0.0, %v399
        %v401 = vpop.f32.mrf.mxu0
        %v402 = vadd.f32 0.0, %v401
        %403 = vdwg.mxu0
        %v412 = vunpack.c.l.b16 %v318
        %v413 = vunpack.c.l.b16 %v319
        %v414 = vunpack.c.l.b16 %v320
        %v415 = vunpack.c.l.b16 %v321
        %v416 = vunpack.c.l.b16 %v322
        %v417 = vunpack.c.l.b16 %v323
        %v418 = vunpack.c.l.b16 %v324
        %v419 = vunpack.c.l.b16 %v325
        %v420 = vpack.c.b16 %v413, %v412
        %v421 = vpack.c.b16 %v415, %v414
        %v422 = vpack.c.b16 %v417, %v416
        %v423 = vpack.c.b16 %v419, %v418
        %v425 = vsel %vm358, %v420, 0
        %v428 = vsel %vm358, %v421, 0
        %v431 = vsel %vm358, %v422, 0
        %v434 = vsel %vm358, %v423, 0
        %v437 = vsel %vm371, %v326, 0
        %439 = vmatpush.bf16.msra.mxu0 0
        %440 = vmatpush.bf16.msra.mxu0 0
        %441 = vmatpush.bf16.msra.mxu0 0
        %442 = vmatpush.bf16.msra.mxu0 0
        %443 = vmatpush.bf16.msra.mxu0 0
        %444 = vmatpush.bf16.msra.mxu0 0
        %445 = vmatpush.bf16.msra.mxu0 0
        %446 = vmatpush.bf16.msra.mxu0 %v437
        %447 = vmatmul.bf16.gmra.mxu0 %v425
        %v448 = vpop.f32.mrf.mxu0
        %v449 = vadd.f32 %v385, %v448
        %v450 = vpop.f32.mrf.mxu0
        %v451 = vadd.f32 %v387, %v450
        %452 = vmatmul.bf16.gmra.mxu0 %v428
        %v453 = vpop.f32.mrf.mxu0
        %v454 = vadd.f32 %v390, %v453
        %v455 = vpop.f32.mrf.mxu0
        %v456 = vadd.f32 %v392, %v455
        %457 = vmatmul.bf16.gmra.mxu0 %v431
        %v458 = vpop.f32.mrf.mxu0
        %v459 = vadd.f32 %v395, %v458
        %v460 = vpop.f32.mrf.mxu0
        %v461 = vadd.f32 %v397, %v460
        %462 = vmatmul.bf16.gmra.mxu0 %v434
        %v463 = vpop.f32.mrf.mxu0
        %v464 = vadd.f32 %v400, %v463
        %v465 = vpop.f32.mrf.mxu0
        %v466 = vadd.f32 %v402, %v465
        %467 = vdwg.mxu0
        %v468 = vld [vmem:[%s315] sm:$0xf]
        %v469 = vld [vmem:[%s315 + $0x4] sm:$0x1]
        %v470 = vld [vmem:[%s315 + $0x8] sm:$0xf]
        %v471 = vld [vmem:[%s315 + $0xc] sm:$0x1]
        %v472 = vld [vmem:[%s315 + $0x10] sm:$0xf]
        %v473 = vld [vmem:[%s315 + $0x14] sm:$0x1]
        %v474 = vld [vmem:[%s315 + $0x18] sm:$0xf]
        %v475 = vld [vmem:[%s315 + $0x1c] sm:$0x1]
        %v476 = vld [vmem:[%s315 + $0x20] sm:$0xf]
        %v477 = vld [vmem:[%s315 + $0x24] sm:$0x1]
        %v478 = vld [vmem:[%s315 + $0x28] sm:$0xf]
        %v479 = vld [vmem:[%s315 + $0x2c] sm:$0x1]
        %v480 = vld [vmem:[%s315 + $0x30] sm:$0xf]
        %v481 = vld [vmem:[%s315 + $0x34] sm:$0x1]
        %v482 = vld [vmem:[%s315 + $0x38] sm:$0xf]
        %v483 = vld [vmem:[%s315 + $0x3c] sm:$0x1]
        %vm484 = vsmask.f32 3328
        %vm485 = vsmask.f32 7440
        %vm486 = vmor %vm484, %vm485
        %v488 = vshrl.u32 %v468, 16
        %v490 = vrot.slane %v488, 4
        %v491 = vshll.u32 %v468, 16
        %v493 = vrot.slane %v491, 5
        %v494 = vor.u32 %v490, %v493
        %v495 = vrot.slane %v494, 4
        %v497 = vshll.u32 %v469, 16
        %v499 = vrot.slane %v497, 5
        %v500 = vsel %vm486, %v495, %v499
        %v502 = vshrl.u32 %v470, 16
        %v504 = vrot.slane %v502, 4
        %v505 = vshll.u32 %v470, 16
        %v507 = vrot.slane %v505, 5
        %v508 = vor.u32 %v504, %v507
        %v509 = vrot.slane %v508, 4
        %v511 = vshll.u32 %v471, 16
        %v513 = vrot.slane %v511, 5
        %v514 = vsel %vm486, %v509, %v513
        %v516 = vshrl.u32 %v472, 16
        %v518 = vrot.slane %v516, 4
        %v519 = vshll.u32 %v472, 16
        %v521 = vrot.slane %v519, 5
        %v522 = vor.u32 %v518, %v521
        %v523 = vrot.slane %v522, 4
        %v525 = vshll.u32 %v473, 16
        %v527 = vrot.slane %v525, 5
        %v528 = vsel %vm486, %v523, %v527
        %v530 = vshrl.u32 %v474, 16
        %v532 = vrot.slane %v530, 4
        %v533 = vshll.u32 %v474, 16
        %v535 = vrot.slane %v533, 5
        %v536 = vor.u32 %v532, %v535
        %v537 = vrot.slane %v536, 4
        %v539 = vshll.u32 %v475, 16
        %v541 = vrot.slane %v539, 5
        %v542 = vsel %vm486, %v537, %v541
        %v544 = vshrl.u32 %v476, 16
        %v546 = vrot.slane %v544, 4
        %v547 = vshll.u32 %v476, 16
        %v549 = vrot.slane %v547, 5
        %v550 = vor.u32 %v546, %v549
        %v551 = vrot.slane %v550, 4
        %v553 = vshll.u32 %v477, 16
        %v555 = vrot.slane %v553, 5
        %v556 = vsel %vm486, %v551, %v555
        %v558 = vshrl.u32 %v478, 16
        %v560 = vrot.slane %v558, 4
        %v561 = vshll.u32 %v478, 16
        %v563 = vrot.slane %v561, 5
        %v564 = vor.u32 %v560, %v563
        %v565 = vrot.slane %v564, 4
        %v567 = vshll.u32 %v479, 16
        %v569 = vrot.slane %v567, 5
        %v570 = vsel %vm486, %v565, %v569
        %v572 = vshrl.u32 %v480, 16
        %v574 = vrot.slane %v572, 4
        %v575 = vshll.u32 %v480, 16
        %v577 = vrot.slane %v575, 5
        %v578 = vor.u32 %v574, %v577
        %v579 = vrot.slane %v578, 4
        %v581 = vshll.u32 %v481, 16
        %v583 = vrot.slane %v581, 5
        %v584 = vsel %vm486, %v579, %v583
        %v586 = vshrl.u32 %v482, 16
        %v588 = vrot.slane %v586, 4
        %v589 = vshll.u32 %v482, 16
        %v591 = vrot.slane %v589, 5
        %v592 = vor.u32 %v588, %v591
        %v593 = vrot.slane %v592, 4
        %v595 = vshll.u32 %v483, 16
        %v597 = vrot.slane %v595, 5
        %v598 = vsel %vm486, %v593, %v597
        %s599 = scalar_lea.vmem %s1, 4
        %v600 = vld [vmem:[%s599] sm:$0x3]
        %v601 = vunpack.c.l.b16 %v500
        %v602 = vunpack.c.l.b16 %v514
        %v603 = vunpack.c.l.b16 %v528
        %v604 = vunpack.c.l.b16 %v542
        %v605 = vunpack.c.l.b16 %v556
        %v606 = vunpack.c.l.b16 %v570
        %v607 = vunpack.c.l.b16 %v584
        %v608 = vunpack.c.l.b16 %v598
        %v609 = vpack.c.b16 %v602, %v601
        %v610 = vpack.c.b16 %v604, %v603
        %v611 = vpack.c.b16 %v606, %v605
        %v612 = vpack.c.b16 %v608, %v607
        %v614 = vsel %vm358, %v609, 0
        %v617 = vsel %vm358, %v610, 0
        %v620 = vsel %vm358, %v611, 0
        %v623 = vsel %vm358, %v612, 0
        %v626 = vsel %vm371, %v600, 0
        %628 = vmatpush.bf16.msra.mxu0 0
        %629 = vmatpush.bf16.msra.mxu0 0
        %630 = vmatpush.bf16.msra.mxu0 0
        %631 = vmatpush.bf16.msra.mxu0 0
        %632 = vmatpush.bf16.msra.mxu0 0
        %633 = vmatpush.bf16.msra.mxu0 0
        %634 = vmatpush.bf16.msra.mxu0 0
        %635 = vmatpush.bf16.msra.mxu0 %v626
        %636 = vmatmul.bf16.gmra.mxu0 %v614
        %v637 = vpop.f32.mrf.mxu0
        %v638 = vadd.f32 0.0, %v637
        %v639 = vpop.f32.mrf.mxu0
        %v640 = vadd.f32 0.0, %v639
        %641 = vmatmul.bf16.gmra.mxu0 %v617
        %v642 = vpop.f32.mrf.mxu0
        %v643 = vadd.f32 0.0, %v642
        %v644 = vpop.f32.mrf.mxu0
        %v645 = vadd.f32 0.0, %v644
        %646 = vmatmul.bf16.gmra.mxu0 %v620
        %v647 = vpop.f32.mrf.mxu0
        %v648 = vadd.f32 0.0, %v647
        %v649 = vpop.f32.mrf.mxu0
        %v650 = vadd.f32 0.0, %v649
        %651 = vmatmul.bf16.gmra.mxu0 %v623
        %v652 = vpop.f32.mrf.mxu0
        %v653 = vadd.f32 0.0, %v652
        %v654 = vpop.f32.mrf.mxu0
        %v655 = vadd.f32 0.0, %v654
        %656 = vdwg.mxu0
        %v657 = vadd.f32 %v449, %v638
        %v658 = vadd.f32 %v451, %v640
        %v659 = vadd.f32 %v454, %v643
        %v660 = vadd.f32 %v456, %v645
        %v661 = vadd.f32 %v459, %v648
        %v662 = vadd.f32 %v461, %v650
        %v663 = vadd.f32 %v464, %v653
        %v664 = vadd.f32 %v466, %v655
        %s665 = scalar_lea.vmem %s315, 144
        %v666 = vld [vmem:[%s665] sm:$0xf]
        %v667 = vld [vmem:[%s665 + $0x8] sm:$0xf]
        %v668 = vld [vmem:[%s665 + $0x10] sm:$0xf]
        %v669 = vld [vmem:[%s665 + $0x18] sm:$0xf]
        %v670 = vld [vmem:[%s665 + $0x20] sm:$0xf]
        %v671 = vld [vmem:[%s665 + $0x28] sm:$0xf]
        %v672 = vld [vmem:[%s665 + $0x30] sm:$0xf]
        %v673 = vld [vmem:[%s665 + $0x38] sm:$0xf]
        %s674 = scalar_lea.vmem %s1, 6
        %v675 = vld [vmem:[%s674] sm:$0x3]
        %v684 = vunpack.c.l.b16 %v666
        %v685 = vunpack.c.l.b16 %v667
        %v686 = vunpack.c.l.b16 %v668
        %v687 = vunpack.c.l.b16 %v669
        %v688 = vunpack.c.l.b16 %v670
        %v689 = vunpack.c.l.b16 %v671
        %v690 = vunpack.c.l.b16 %v672
        %v691 = vunpack.c.l.b16 %v673
        %v692 = vpack.c.b16 %v685, %v684
        %v693 = vpack.c.b16 %v687, %v686
        %v694 = vpack.c.b16 %v689, %v688
        %v695 = vpack.c.b16 %v691, %v690
        %v697 = vsel %vm358, %v692, 0
        %v700 = vsel %vm358, %v693, 0
        %v703 = vsel %vm358, %v694, 0
        %v706 = vsel %vm358, %v695, 0
        %v709 = vsel %vm371, %v675, 0
        %711 = vmatpush.bf16.msra.mxu0 0
        %712 = vmatpush.bf16.msra.mxu0 0
        %713 = vmatpush.bf16.msra.mxu0 0
        %714 = vmatpush.bf16.msra.mxu0 0
        %715 = vmatpush.bf16.msra.mxu0 0
        %716 = vmatpush.bf16.msra.mxu0 0
        %717 = vmatpush.bf16.msra.mxu0 0
        %718 = vmatpush.bf16.msra.mxu0 %v709
        %719 = vmatmul.bf16.gmra.mxu0 %v697
        %v720 = vpop.f32.mrf.mxu0
        %v721 = vadd.f32 0.0, %v720
        %v722 = vpop.f32.mrf.mxu0
        %v723 = vadd.f32 0.0, %v722
        %724 = vmatmul.bf16.gmra.mxu0 %v700
        %v725 = vpop.f32.mrf.mxu0
        %v726 = vadd.f32 0.0, %v725
        %v727 = vpop.f32.mrf.mxu0
        %v728 = vadd.f32 0.0, %v727
        %729 = vmatmul.bf16.gmra.mxu0 %v703
        %v730 = vpop.f32.mrf.mxu0
        %v731 = vadd.f32 0.0, %v730
        %v732 = vpop.f32.mrf.mxu0
        %v733 = vadd.f32 0.0, %v732
        %734 = vmatmul.bf16.gmra.mxu0 %v706
        %v735 = vpop.f32.mrf.mxu0
        %v736 = vadd.f32 0.0, %v735
        %v737 = vpop.f32.mrf.mxu0
        %v738 = vadd.f32 0.0, %v737
        %739 = vdwg.mxu0
        %v740 = vadd.f32 %v657, %v721
        %v741 = vadd.f32 %v658, %v723
        %v742 = vadd.f32 %v659, %v726
        %v743 = vadd.f32 %v660, %v728
        %v744 = vadd.f32 %v661, %v731
        %v745 = vadd.f32 %v662, %v733
        %v746 = vadd.f32 %v663, %v736
        %v747 = vadd.f32 %v664, %v738
        %s748 = scalar_lea.vmem %s315, 216
        %v749 = vld [vmem:[%s748] sm:$0xf]
        %v750 = vld [vmem:[%s748 + $0x8] sm:$0xf]
        %v751 = vld [vmem:[%s748 + $0x10] sm:$0xf]
        %v752 = vld [vmem:[%s748 + $0x18] sm:$0xf]
        %v753 = vld [vmem:[%s748 + $0x20] sm:$0xf]
        %v754 = vld [vmem:[%s748 + $0x28] sm:$0xf]
        %v755 = vld [vmem:[%s748 + $0x30] sm:$0xf]
        %v756 = vld [vmem:[%s748 + $0x38] sm:$0xf]
        %s757 = scalar_lea.vmem %s1, 8
        %v758 = vld [vmem:[%s757] sm:$0x3]
        %v767 = vunpack.c.l.b16 %v749
        %v768 = vunpack.c.l.b16 %v750
        %v769 = vunpack.c.l.b16 %v751
        %v770 = vunpack.c.l.b16 %v752
        %v771 = vunpack.c.l.b16 %v753
        %v772 = vunpack.c.l.b16 %v754
        %v773 = vunpack.c.l.b16 %v755
        %v774 = vunpack.c.l.b16 %v756
        %v775 = vpack.c.b16 %v768, %v767
        %v776 = vpack.c.b16 %v770, %v769
        %v777 = vpack.c.b16 %v772, %v771
        %v778 = vpack.c.b16 %v774, %v773
        %v780 = vsel %vm358, %v775, 0
        %v783 = vsel %vm358, %v776, 0
        %v786 = vsel %vm358, %v777, 0
        %v789 = vsel %vm358, %v778, 0
        %v792 = vsel %vm371, %v758, 0
        %794 = vmatpush.bf16.msra.mxu0 0
        %795 = vmatpush.bf16.msra.mxu0 0
        %796 = vmatpush.bf16.msra.mxu0 0
        %797 = vmatpush.bf16.msra.mxu0 0
        %798 = vmatpush.bf16.msra.mxu0 0
        %799 = vmatpush.bf16.msra.mxu0 0
        %800 = vmatpush.bf16.msra.mxu0 0
        %801 = vmatpush.bf16.msra.mxu0 %v792
        %802 = vmatmul.bf16.gmra.mxu0 %v780
        %v803 = vpop.f32.mrf.mxu0
        %v804 = vadd.f32 0.0, %v803
        %v805 = vpop.f32.mrf.mxu0
        %v806 = vadd.f32 0.0, %v805
        %807 = vmatmul.bf16.gmra.mxu0 %v783
        %v808 = vpop.f32.mrf.mxu0
        %v809 = vadd.f32 0.0, %v808
        %v810 = vpop.f32.mrf.mxu0
        %v811 = vadd.f32 0.0, %v810
        %812 = vmatmul.bf16.gmra.mxu0 %v786
        %v813 = vpop.f32.mrf.mxu0
        %v814 = vadd.f32 0.0, %v813
        %v815 = vpop.f32.mrf.mxu0
        %v816 = vadd.f32 0.0, %v815
        %817 = vmatmul.bf16.gmra.mxu0 %v789
        %v818 = vpop.f32.mrf.mxu0
        %v819 = vadd.f32 0.0, %v818
        %v820 = vpop.f32.mrf.mxu0
        %v821 = vadd.f32 0.0, %v820
        %822 = vdwg.mxu0
        %v823 = vadd.f32 %v740, %v804
        %v824 = vadd.f32 %v741, %v806
        %v825 = vadd.f32 %v742, %v809
        %v826 = vadd.f32 %v743, %v811
        %v827 = vadd.f32 %v744, %v814
        %v828 = vadd.f32 %v745, %v816
        %v829 = vadd.f32 %v746, %v819
        %v830 = vadd.f32 %v747, %v821
        %v831 = vld [vmem:[%s665] sm:$0xf]
        %v832 = vld [vmem:[%s665 + $0x4] sm:$0x1]
        %v833 = vld [vmem:[%s665 + $0x8] sm:$0xf]
        %v834 = vld [vmem:[%s665 + $0xc] sm:$0x1]
        %v835 = vld [vmem:[%s665 + $0x10] sm:$0xf]
        %v836 = vld [vmem:[%s665 + $0x14] sm:$0x1]
        %v837 = vld [vmem:[%s665 + $0x18] sm:$0xf]
        %v838 = vld [vmem:[%s665 + $0x1c] sm:$0x1]
        %v839 = vld [vmem:[%s665 + $0x20] sm:$0xf]
        %v840 = vld [vmem:[%s665 + $0x24] sm:$0x1]
        %v841 = vld [vmem:[%s665 + $0x28] sm:$0xf]
        %v842 = vld [vmem:[%s665 + $0x2c] sm:$0x1]
        %v843 = vld [vmem:[%s665 + $0x30] sm:$0xf]
        %v844 = vld [vmem:[%s665 + $0x34] sm:$0x1]
        %v845 = vld [vmem:[%s665 + $0x38] sm:$0xf]
        %v846 = vld [vmem:[%s665 + $0x3c] sm:$0x1]
        %v848 = vshrl.u32 %v831, 16
        %v850 = vrot.slane %v848, 4
        %v851 = vshll.u32 %v831, 16
        %v853 = vrot.slane %v851, 5
        %v854 = vor.u32 %v850, %v853
        %v855 = vrot.slane %v854, 4
        %v857 = vshll.u32 %v832, 16
        %v859 = vrot.slane %v857, 5
        %v860 = vsel %vm486, %v855, %v859
        %v862 = vshrl.u32 %v833, 16
        %v864 = vrot.slane %v862, 4
        %v865 = vshll.u32 %v833, 16
        %v867 = vrot.slane %v865, 5
        %v868 = vor.u32 %v864, %v867
        %v869 = vrot.slane %v868, 4
        %v871 = vshll.u32 %v834, 16
        %v873 = vrot.slane %v871, 5
        %v874 = vsel %vm486, %v869, %v873
        %v876 = vshrl.u32 %v835, 16
        %v878 = vrot.slane %v876, 4
        %v879 = vshll.u32 %v835, 16
        %v881 = vrot.slane %v879, 5
        %v882 = vor.u32 %v878, %v881
        %v883 = vrot.slane %v882, 4
        %v885 = vshll.u32 %v836, 16
        %v887 = vrot.slane %v885, 5
        %v888 = vsel %vm486, %v883, %v887
        %v890 = vshrl.u32 %v837, 16
        %v892 = vrot.slane %v890, 4
        %v893 = vshll.u32 %v837, 16
        %v895 = vrot.slane %v893, 5
        %v896 = vor.u32 %v892, %v895
        %v897 = vrot.slane %v896, 4
        %v899 = vshll.u32 %v838, 16
        %v901 = vrot.slane %v899, 5
        %v902 = vsel %vm486, %v897, %v901
        %v904 = vshrl.u32 %v839, 16
        %v906 = vrot.slane %v904, 4
        %v907 = vshll.u32 %v839, 16
        %v909 = vrot.slane %v907, 5
        %v910 = vor.u32 %v906, %v909
        %v911 = vrot.slane %v910, 4
        %v913 = vshll.u32 %v840, 16
        %v915 = vrot.slane %v913, 5
        %v916 = vsel %vm486, %v911, %v915
        %v918 = vshrl.u32 %v841, 16
        %v920 = vrot.slane %v918, 4
        %v921 = vshll.u32 %v841, 16
        %v923 = vrot.slane %v921, 5
        %v924 = vor.u32 %v920, %v923
        %v925 = vrot.slane %v924, 4
        %v927 = vshll.u32 %v842, 16
        %v929 = vrot.slane %v927, 5
        %v930 = vsel %vm486, %v925, %v929
        %v932 = vshrl.u32 %v843, 16
        %v934 = vrot.slane %v932, 4
        %v935 = vshll.u32 %v843, 16
        %v937 = vrot.slane %v935, 5
        %v938 = vor.u32 %v934, %v937
        %v939 = vrot.slane %v938, 4
        %v941 = vshll.u32 %v844, 16
        %v943 = vrot.slane %v941, 5
        %v944 = vsel %vm486, %v939, %v943
        %v946 = vshrl.u32 %v845, 16
        %v948 = vrot.slane %v946, 4
        %v949 = vshll.u32 %v845, 16
        %v951 = vrot.slane %v949, 5
        %v952 = vor.u32 %v948, %v951
        %v953 = vrot.slane %v952, 4
        %v955 = vshll.u32 %v846, 16
        %v957 = vrot.slane %v955, 5
        %v958 = vsel %vm486, %v953, %v957
        %s959 = scalar_lea.vmem %s1, 10
        %v960 = vld [vmem:[%s959] sm:$0x3]
        %v961 = vunpack.c.l.b16 %v860
        %v962 = vunpack.c.l.b16 %v874
        %v963 = vunpack.c.l.b16 %v888
        %v964 = vunpack.c.l.b16 %v902
        %v965 = vunpack.c.l.b16 %v916
        %v966 = vunpack.c.l.b16 %v930
        %v967 = vunpack.c.l.b16 %v944
        %v968 = vunpack.c.l.b16 %v958
        %v969 = vpack.c.b16 %v962, %v961
        %v970 = vpack.c.b16 %v964, %v963
        %v971 = vpack.c.b16 %v966, %v965
        %v972 = vpack.c.b16 %v968, %v967
        %v974 = vsel %vm358, %v969, 0
        %v977 = vsel %vm358, %v970, 0
        %v980 = vsel %vm358, %v971, 0
        %v983 = vsel %vm358, %v972, 0
        %v986 = vsel %vm371, %v960, 0
        %988 = vmatpush.bf16.msra.mxu0 0
        %989 = vmatpush.bf16.msra.mxu0 0
        %990 = vmatpush.bf16.msra.mxu0 0
        %991 = vmatpush.bf16.msra.mxu0 0
        %992 = vmatpush.bf16.msra.mxu0 0
        %993 = vmatpush.bf16.msra.mxu0 0
        %994 = vmatpush.bf16.msra.mxu0 0
        %995 = vmatpush.bf16.msra.mxu0 %v986
        %996 = vmatmul.bf16.gmra.mxu0 %v974
        %v997 = vpop.f32.mrf.mxu0
        %v998 = vadd.f32 0.0, %v997
        %v999 = vpop.f32.mrf.mxu0
        %v1000 = vadd.f32 0.0, %v999
        %1001 = vmatmul.bf16.gmra.mxu0 %v977
        %v1002 = vpop.f32.mrf.mxu0
        %v1003 = vadd.f32 0.0, %v1002
        %v1004 = vpop.f32.mrf.mxu0
        %v1005 = vadd.f32 0.0, %v1004
        %1006 = vmatmul.bf16.gmra.mxu0 %v980
        %v1007 = vpop.f32.mrf.mxu0
        %v1008 = vadd.f32 0.0, %v1007
        %v1009 = vpop.f32.mrf.mxu0
        %v1010 = vadd.f32 0.0, %v1009
        %1011 = vmatmul.bf16.gmra.mxu0 %v983
        %v1012 = vpop.f32.mrf.mxu0
        %v1013 = vadd.f32 0.0, %v1012
        %v1014 = vpop.f32.mrf.mxu0
        %v1015 = vadd.f32 0.0, %v1014
        %1016 = vdwg.mxu0
        %v1017 = vadd.f32 %v823, %v998
        %v1018 = vadd.f32 %v824, %v1000
        %v1019 = vadd.f32 %v825, %v1003
        %v1020 = vadd.f32 %v826, %v1005
        %v1021 = vadd.f32 %v827, %v1008
        %v1022 = vadd.f32 %v828, %v1010
        %v1023 = vadd.f32 %v829, %v1013
        %v1024 = vadd.f32 %v830, %v1015
        %s1025 = scalar_lea.vmem %s315, 8
        %v1026 = vld [vmem:[%s1025] sm:$0xf]
        %v1027 = vld [vmem:[%s1025 + $0x8] sm:$0xf]
        %v1028 = vld [vmem:[%s1025 + $0x10] sm:$0xf]
        %v1029 = vld [vmem:[%s1025 + $0x18] sm:$0xf]
        %v1030 = vld [vmem:[%s1025 + $0x20] sm:$0xf]
        %v1031 = vld [vmem:[%s1025 + $0x28] sm:$0xf]
        %v1032 = vld [vmem:[%s1025 + $0x30] sm:$0xf]
        %v1033 = vld [vmem:[%s1025 + $0x38] sm:$0xf]
        %s1034 = scalar_lea.vmem %s1, 12
        %v1035 = vld [vmem:[%s1034] sm:$0x3]
        %v1044 = vunpack.c.l.b16 %v1026
        %v1045 = vunpack.c.l.b16 %v1027
        %v1046 = vunpack.c.l.b16 %v1028
        %v1047 = vunpack.c.l.b16 %v1029
        %v1048 = vunpack.c.l.b16 %v1030
        %v1049 = vunpack.c.l.b16 %v1031
        %v1050 = vunpack.c.l.b16 %v1032
        %v1051 = vunpack.c.l.b16 %v1033
        %v1052 = vpack.c.b16 %v1045, %v1044
        %v1053 = vpack.c.b16 %v1047, %v1046
        %v1054 = vpack.c.b16 %v1049, %v1048
        %v1055 = vpack.c.b16 %v1051, %v1050
        %v1057 = vsel %vm358, %v1052, 0
        %v1060 = vsel %vm358, %v1053, 0
        %v1063 = vsel %vm358, %v1054, 0
        %v1066 = vsel %vm358, %v1055, 0
        %v1069 = vsel %vm371, %v1035, 0
        %1071 = vmatpush.bf16.msra.mxu0 0
        %1072 = vmatpush.bf16.msra.mxu0 0
        %1073 = vmatpush.bf16.msra.mxu0 0
        %1074 = vmatpush.bf16.msra.mxu0 0
        %1075 = vmatpush.bf16.msra.mxu0 0
        %1076 = vmatpush.bf16.msra.mxu0 0
        %1077 = vmatpush.bf16.msra.mxu0 0
        %1078 = vmatpush.bf16.msra.mxu0 %v1069
        %1079 = vmatmul.bf16.gmra.mxu0 %v1057
        %v1080 = vpop.f32.mrf.mxu0
        %v1081 = vadd.f32 0.0, %v1080
        %v1082 = vpop.f32.mrf.mxu0
        %v1083 = vadd.f32 0.0, %v1082
        %1084 = vmatmul.bf16.gmra.mxu0 %v1060
        %v1085 = vpop.f32.mrf.mxu0
        %v1086 = vadd.f32 0.0, %v1085
        %v1087 = vpop.f32.mrf.mxu0
        %v1088 = vadd.f32 0.0, %v1087
        %1089 = vmatmul.bf16.gmra.mxu0 %v1063
        %v1090 = vpop.f32.mrf.mxu0
        %v1091 = vadd.f32 0.0, %v1090
        %v1092 = vpop.f32.mrf.mxu0
        %v1093 = vadd.f32 0.0, %v1092
        %1094 = vmatmul.bf16.gmra.mxu0 %v1066
        %v1095 = vpop.f32.mrf.mxu0
        %v1096 = vadd.f32 0.0, %v1095
        %v1097 = vpop.f32.mrf.mxu0
        %v1098 = vadd.f32 0.0, %v1097
        %1099 = vdwg.mxu0
        %v1100 = vadd.f32 %v1017, %v1081
        %v1101 = vadd.f32 %v1018, %v1083
        %v1102 = vadd.f32 %v1019, %v1086
        %v1103 = vadd.f32 %v1020, %v1088
        %v1104 = vadd.f32 %v1021, %v1091
        %v1105 = vadd.f32 %v1022, %v1093
        %v1106 = vadd.f32 %v1023, %v1096
        %v1107 = vadd.f32 %v1024, %v1098
        %s1108 = scalar_lea.vmem %s315, 80
        %v1109 = vld [vmem:[%s1108] sm:$0xf]
        %v1110 = vld [vmem:[%s1108 + $0x8] sm:$0xf]
        %v1111 = vld [vmem:[%s1108 + $0x10] sm:$0xf]
        %v1112 = vld [vmem:[%s1108 + $0x18] sm:$0xf]
        %v1113 = vld [vmem:[%s1108 + $0x20] sm:$0xf]
        %v1114 = vld [vmem:[%s1108 + $0x28] sm:$0xf]
        %v1115 = vld [vmem:[%s1108 + $0x30] sm:$0xf]
        %v1116 = vld [vmem:[%s1108 + $0x38] sm:$0xf]
        %s1117 = scalar_lea.vmem %s1, 14
        %v1118 = vld [vmem:[%s1117] sm:$0x3]
        %v1127 = vunpack.c.l.b16 %v1109
        %v1128 = vunpack.c.l.b16 %v1110
        %v1129 = vunpack.c.l.b16 %v1111
        %v1130 = vunpack.c.l.b16 %v1112
        %v1131 = vunpack.c.l.b16 %v1113
        %v1132 = vunpack.c.l.b16 %v1114
        %v1133 = vunpack.c.l.b16 %v1115
        %v1134 = vunpack.c.l.b16 %v1116
        %v1135 = vpack.c.b16 %v1128, %v1127
        %v1136 = vpack.c.b16 %v1130, %v1129
        %v1137 = vpack.c.b16 %v1132, %v1131
        %v1138 = vpack.c.b16 %v1134, %v1133
        %v1140 = vsel %vm358, %v1135, 0
        %v1143 = vsel %vm358, %v1136, 0
        %v1146 = vsel %vm358, %v1137, 0
        %v1149 = vsel %vm358, %v1138, 0
        %v1152 = vsel %vm371, %v1118, 0
        %1154 = vmatpush.bf16.msra.mxu0 0
        %1155 = vmatpush.bf16.msra.mxu0 0
        %1156 = vmatpush.bf16.msra.mxu0 0
        %1157 = vmatpush.bf16.msra.mxu0 0
        %1158 = vmatpush.bf16.msra.mxu0 0
        %1159 = vmatpush.bf16.msra.mxu0 0
        %1160 = vmatpush.bf16.msra.mxu0 0
        %1161 = vmatpush.bf16.msra.mxu0 %v1152
        %1162 = vmatmul.bf16.gmra.mxu0 %v1140
        %v1163 = vpop.f32.mrf.mxu0
        %v1164 = vadd.f32 0.0, %v1163
        %v1165 = vpop.f32.mrf.mxu0
        %v1166 = vadd.f32 0.0, %v1165
        %1167 = vmatmul.bf16.gmra.mxu0 %v1143
        %v1168 = vpop.f32.mrf.mxu0
        %v1169 = vadd.f32 0.0, %v1168
        %v1170 = vpop.f32.mrf.mxu0
        %v1171 = vadd.f32 0.0, %v1170
        %1172 = vmatmul.bf16.gmra.mxu0 %v1146
        %v1173 = vpop.f32.mrf.mxu0
        %v1174 = vadd.f32 0.0, %v1173
        %v1175 = vpop.f32.mrf.mxu0
        %v1176 = vadd.f32 0.0, %v1175
        %1177 = vmatmul.bf16.gmra.mxu0 %v1149
        %v1178 = vpop.f32.mrf.mxu0
        %v1179 = vadd.f32 0.0, %v1178
        %v1180 = vpop.f32.mrf.mxu0
        %v1181 = vadd.f32 0.0, %v1180
        %1182 = vdwg.mxu0
        %v1183 = vadd.f32 %v1100, %v1164
        %v1184 = vadd.f32 %v1101, %v1166
        %v1185 = vadd.f32 %v1102, %v1169
        %v1186 = vadd.f32 %v1103, %v1171
        %v1187 = vadd.f32 %v1104, %v1174
        %v1188 = vadd.f32 %v1105, %v1176
        %v1189 = vadd.f32 %v1106, %v1179
        %v1190 = vadd.f32 %v1107, %v1181
        %v1191 = vld [vmem:[%s1025] sm:$0xf]
        %v1192 = vld [vmem:[%s1025 + $0x4] sm:$0x1]
        %v1193 = vld [vmem:[%s1025 + $0x8] sm:$0xf]
        %v1194 = vld [vmem:[%s1025 + $0xc] sm:$0x1]
        %v1195 = vld [vmem:[%s1025 + $0x10] sm:$0xf]
        %v1196 = vld [vmem:[%s1025 + $0x14] sm:$0x1]
        %v1197 = vld [vmem:[%s1025 + $0x18] sm:$0xf]
        %v1198 = vld [vmem:[%s1025 + $0x1c] sm:$0x1]
        %v1199 = vld [vmem:[%s1025 + $0x20] sm:$0xf]
        %v1200 = vld [vmem:[%s1025 + $0x24] sm:$0x1]
        %v1201 = vld [vmem:[%s1025 + $0x28] sm:$0xf]
        %v1202 = vld [vmem:[%s1025 + $0x2c] sm:$0x1]
        %v1203 = vld [vmem:[%s1025 + $0x30] sm:$0xf]
        %v1204 = vld [vmem:[%s1025 + $0x34] sm:$0x1]
        %v1205 = vld [vmem:[%s1025 + $0x38] sm:$0xf]
        %v1206 = vld [vmem:[%s1025 + $0x3c] sm:$0x1]
        %v1208 = vshrl.u32 %v1191, 16
        %v1210 = vrot.slane %v1208, 4
        %v1211 = vshll.u32 %v1191, 16
        %v1213 = vrot.slane %v1211, 5
        %v1214 = vor.u32 %v1210, %v1213
        %v1215 = vrot.slane %v1214, 4
        %v1217 = vshll.u32 %v1192, 16
        %v1219 = vrot.slane %v1217, 5
        %v1220 = vsel %vm486, %v1215, %v1219
        %v1222 = vshrl.u32 %v1193, 16
        %v1224 = vrot.slane %v1222, 4
        %v1225 = vshll.u32 %v1193, 16
        %v1227 = vrot.slane %v1225, 5
        %v1228 = vor.u32 %v1224, %v1227
        %v1229 = vrot.slane %v1228, 4
        %v1231 = vshll.u32 %v1194, 16
        %v1233 = vrot.slane %v1231, 5
        %v1234 = vsel %vm486, %v1229, %v1233
        %v1236 = vshrl.u32 %v1195, 16
        %v1238 = vrot.slane %v1236, 4
        %v1239 = vshll.u32 %v1195, 16
        %v1241 = vrot.slane %v1239, 5
        %v1242 = vor.u32 %v1238, %v1241
        %v1243 = vrot.slane %v1242, 4
        %v1245 = vshll.u32 %v1196, 16
        %v1247 = vrot.slane %v1245, 5
        %v1248 = vsel %vm486, %v1243, %v1247
        %v1250 = vshrl.u32 %v1197, 16
        %v1252 = vrot.slane %v1250, 4
        %v1253 = vshll.u32 %v1197, 16
        %v1255 = vrot.slane %v1253, 5
        %v1256 = vor.u32 %v1252, %v1255
        %v1257 = vrot.slane %v1256, 4
        %v1259 = vshll.u32 %v1198, 16
        %v1261 = vrot.slane %v1259, 5
        %v1262 = vsel %vm486, %v1257, %v1261
        %v1264 = vshrl.u32 %v1199, 16
        %v1266 = vrot.slane %v1264, 4
        %v1267 = vshll.u32 %v1199, 16
        %v1269 = vrot.slane %v1267, 5
        %v1270 = vor.u32 %v1266, %v1269
        %v1271 = vrot.slane %v1270, 4
        %v1273 = vshll.u32 %v1200, 16
        %v1275 = vrot.slane %v1273, 5
        %v1276 = vsel %vm486, %v1271, %v1275
        %v1278 = vshrl.u32 %v1201, 16
        %v1280 = vrot.slane %v1278, 4
        %v1281 = vshll.u32 %v1201, 16
        %v1283 = vrot.slane %v1281, 5
        %v1284 = vor.u32 %v1280, %v1283
        %v1285 = vrot.slane %v1284, 4
        %v1287 = vshll.u32 %v1202, 16
        %v1289 = vrot.slane %v1287, 5
        %v1290 = vsel %vm486, %v1285, %v1289
        %v1292 = vshrl.u32 %v1203, 16
        %v1294 = vrot.slane %v1292, 4
        %v1295 = vshll.u32 %v1203, 16
        %v1297 = vrot.slane %v1295, 5
        %v1298 = vor.u32 %v1294, %v1297
        %v1299 = vrot.slane %v1298, 4
        %v1301 = vshll.u32 %v1204, 16
        %v1303 = vrot.slane %v1301, 5
        %v1304 = vsel %vm486, %v1299, %v1303
        %v1306 = vshrl.u32 %v1205, 16
        %v1308 = vrot.slane %v1306, 4
        %v1309 = vshll.u32 %v1205, 16
        %v1311 = vrot.slane %v1309, 5
        %v1312 = vor.u32 %v1308, %v1311
        %v1313 = vrot.slane %v1312, 4
        %v1315 = vshll.u32 %v1206, 16
        %v1317 = vrot.slane %v1315, 5
        %v1318 = vsel %vm486, %v1313, %v1317
        %s1319 = scalar_lea.vmem %s1, 16
        %v1320 = vld [vmem:[%s1319] sm:$0x3]
        %v1321 = vunpack.c.l.b16 %v1220
        %v1322 = vunpack.c.l.b16 %v1234
        %v1323 = vunpack.c.l.b16 %v1248
        %v1324 = vunpack.c.l.b16 %v1262
        %v1325 = vunpack.c.l.b16 %v1276
        %v1326 = vunpack.c.l.b16 %v1290
        %v1327 = vunpack.c.l.b16 %v1304
        %v1328 = vunpack.c.l.b16 %v1318
        %v1329 = vpack.c.b16 %v1322, %v1321
        %v1330 = vpack.c.b16 %v1324, %v1323
        %v1331 = vpack.c.b16 %v1326, %v1325
        %v1332 = vpack.c.b16 %v1328, %v1327
        %v1334 = vsel %vm358, %v1329, 0
        %v1337 = vsel %vm358, %v1330, 0
        %v1340 = vsel %vm358, %v1331, 0
        %v1343 = vsel %vm358, %v1332, 0
        %v1346 = vsel %vm371, %v1320, 0
        %1348 = vmatpush.bf16.msra.mxu0 0
        %1349 = vmatpush.bf16.msra.mxu0 0
        %1350 = vmatpush.bf16.msra.mxu0 0
        %1351 = vmatpush.bf16.msra.mxu0 0
        %1352 = vmatpush.bf16.msra.mxu0 0
        %1353 = vmatpush.bf16.msra.mxu0 0
        %1354 = vmatpush.bf16.msra.mxu0 0
        %1355 = vmatpush.bf16.msra.mxu0 %v1346
        %1356 = vmatmul.bf16.gmra.mxu0 %v1334
        %v1357 = vpop.f32.mrf.mxu0
        %v1358 = vadd.f32 0.0, %v1357
        %v1359 = vpop.f32.mrf.mxu0
        %v1360 = vadd.f32 0.0, %v1359
        %1361 = vmatmul.bf16.gmra.mxu0 %v1337
        %v1362 = vpop.f32.mrf.mxu0
        %v1363 = vadd.f32 0.0, %v1362
        %v1364 = vpop.f32.mrf.mxu0
        %v1365 = vadd.f32 0.0, %v1364
        %1366 = vmatmul.bf16.gmra.mxu0 %v1340
        %v1367 = vpop.f32.mrf.mxu0
        %v1368 = vadd.f32 0.0, %v1367
        %v1369 = vpop.f32.mrf.mxu0
        %v1370 = vadd.f32 0.0, %v1369
        %1371 = vmatmul.bf16.gmra.mxu0 %v1343
        %v1372 = vpop.f32.mrf.mxu0
        %v1373 = vadd.f32 0.0, %v1372
        %v1374 = vpop.f32.mrf.mxu0
        %v1375 = vadd.f32 0.0, %v1374
        %1376 = vdwg.mxu0
        %v1377 = vadd.f32 %v1183, %v1358
        %v1378 = vadd.f32 %v1184, %v1360
        %v1379 = vadd.f32 %v1185, %v1363
        %v1380 = vadd.f32 %v1186, %v1365
        %v1381 = vadd.f32 %v1187, %v1368
        %v1382 = vadd.f32 %v1188, %v1370
        %v1383 = vadd.f32 %v1189, %v1373
        %v1384 = vadd.f32 %v1190, %v1375
        %vm1385 = vcmask 64512
        %v1386 = vsel %vm1385, %v1377, 0.0
        %v1387 = vsel %vm1385, %v1378, 0.0
        %v1388 = vadd.f32 %v1386, %v1387
        %v1389 = vsel %vm1385, %v1379, 0.0
        %v1390 = vadd.f32 %v1388, %v1389
        %v1391 = vsel %vm1385, %v1380, 0.0
        %v1392 = vadd.f32 %v1390, %v1391
        %v1393 = vsel %vm1385, %v1381, 0.0
        %v1394 = vadd.f32 %v1392, %v1393
        %v1395 = vsel %vm1385, %v1382, 0.0
        %v1396 = vadd.f32 %v1394, %v1395
        %v1397 = vsel %vm1385, %v1383, 0.0
        %v1398 = vadd.f32 %v1396, %v1397
        %v1399 = vsel %vm1385, %v1384, 0.0
        %v1400 = vadd.f32 %v1398, %v1399
        %v1401 = vrot.slane %v1400, 4
        %v1402 = vadd.f32 %v1400, %v1401
        %v1403 = vrot.slane %v1402, 2
        %v1404 = vadd.f32 %v1402, %v1403
        %v1405 = vrot.slane %v1404, 1
        %v1406 = vadd.f32 %v1404, %v1405
        %1407 = vst.msk [vmem:[%s288] sm:$0xff] %vm1385, %v1406
        %v1408 = vmul.f32 %v1377, %v1377
        %v1409 = vmul.f32 %v1378, %v1378
        %v1410 = vmul.f32 %v1379, %v1379
        %v1411 = vmul.f32 %v1380, %v1380
        %v1412 = vmul.f32 %v1381, %v1381
        %v1413 = vmul.f32 %v1382, %v1382
        %v1414 = vmul.f32 %v1383, %v1383
        %v1415 = vmul.f32 %v1384, %v1384
        %v1416 = vsel %vm1385, %v1408, 0.0
        %v1417 = vsel %vm1385, %v1409, 0.0
        %v1418 = vadd.f32 %v1416, %v1417
        %v1419 = vsel %vm1385, %v1410, 0.0
        %v1420 = vadd.f32 %v1418, %v1419
        %v1421 = vsel %vm1385, %v1411, 0.0
        %v1422 = vadd.f32 %v1420, %v1421
        %v1423 = vsel %vm1385, %v1412, 0.0
        %v1424 = vadd.f32 %v1422, %v1423
        %v1425 = vsel %vm1385, %v1413, 0.0
        %v1426 = vadd.f32 %v1424, %v1425
        %v1427 = vsel %vm1385, %v1414, 0.0
        %v1428 = vadd.f32 %v1426, %v1427
        %v1429 = vsel %vm1385, %v1415, 0.0
        %v1430 = vadd.f32 %v1428, %v1429
        %v1431 = vrot.slane %v1430, 4
        %v1432 = vadd.f32 %v1430, %v1431
        %v1433 = vrot.slane %v1432, 2
        %v1434 = vadd.f32 %v1432, %v1433
        %v1435 = vrot.slane %v1434, 1
        %v1436 = vadd.f32 %v1434, %v1435
        %1437 = vst.msk [vmem:[%s295] sm:$0xff] %vm1385, %v1436
        %v1438 = vpack.c.bf16 %v1377, %v1377
        %v1439 = vpack.c.bf16 %v1378, %v1378
        %v1440 = vpack.c.bf16 %v1379, %v1379
        %v1441 = vpack.c.bf16 %v1380, %v1380
        %v1442 = vpack.c.bf16 %v1381, %v1381
        %v1443 = vpack.c.bf16 %v1382, %v1382
        %v1444 = vpack.c.bf16 %v1383, %v1383
        %v1445 = vpack.c.bf16 %v1384, %v1384
        %vm1446 = vcmask 60416
        %1447 = vst.msk [vmem:[%s281] sm:$0xf] %vm1446, %v1438
        %1448 = vst.msk [vmem:[%s281 + $0x4] sm:$0xf] %vm1446, %v1439
        %1449 = vst.msk [vmem:[%s281 + $0x8] sm:$0xf] %vm1446, %v1440
        %1450 = vst.msk [vmem:[%s281 + $0xc] sm:$0xf] %vm1446, %v1441
        %1451 = vst.msk [vmem:[%s281 + $0x10] sm:$0xf] %vm1446, %v1442
        %1452 = vst.msk [vmem:[%s281 + $0x14] sm:$0xf] %vm1446, %v1443
        %1453 = vst.msk [vmem:[%s281 + $0x18] sm:$0xf] %vm1446, %v1444
        %1454 = vst.msk [vmem:[%s281 + $0x1c] sm:$0xf] %vm1446, %v1445
        %v1455 = vld [vmem:[%s748] sm:$0xf]
        %v1456 = vld [vmem:[%s748 + $0x8] sm:$0xf]
        %v1457 = vld [vmem:[%s748 + $0x10] sm:$0xf]
        %v1458 = vld [vmem:[%s748 + $0x18] sm:$0xf]
        %v1459 = vld [vmem:[%s748 + $0x20] sm:$0xf]
        %v1460 = vld [vmem:[%s748 + $0x28] sm:$0xf]
        %v1461 = vld [vmem:[%s748 + $0x30] sm:$0xf]
        %v1462 = vld [vmem:[%s748 + $0x38] sm:$0xf]
        %v1463 = vld [vmem:[%s2] sm:$0x3]
        %v1472 = vunpack.c.l.b16 %v1455
        %v1473 = vunpack.c.l.b16 %v1456
        %v1474 = vunpack.c.l.b16 %v1457
        %v1475 = vunpack.c.l.b16 %v1458
        %v1476 = vunpack.c.l.b16 %v1459
        %v1477 = vunpack.c.l.b16 %v1460
        %v1478 = vunpack.c.l.b16 %v1461
        %v1479 = vunpack.c.l.b16 %v1462
        %v1480 = vpack.c.b16 %v1473, %v1472
        %v1481 = vpack.c.b16 %v1475, %v1474
        %v1482 = vpack.c.b16 %v1477, %v1476
        %v1483 = vpack.c.b16 %v1479, %v1478
        %v1485 = vsel %vm358, %v1480, 0
        %v1488 = vsel %vm358, %v1481, 0
        %v1491 = vsel %vm358, %v1482, 0
        %v1494 = vsel %vm358, %v1483, 0
        %v1497 = vsel %vm371, %v1463, 0
        %1499 = vmatpush.bf16.msra.mxu0 0
        %1500 = vmatpush.bf16.msra.mxu0 0
        %1501 = vmatpush.bf16.msra.mxu0 0
        %1502 = vmatpush.bf16.msra.mxu0 0
        %1503 = vmatpush.bf16.msra.mxu0 0
        %1504 = vmatpush.bf16.msra.mxu0 0
        %1505 = vmatpush.bf16.msra.mxu0 0
        %1506 = vmatpush.bf16.msra.mxu0 %v1497
        %1507 = vmatmul.bf16.gmra.mxu0 %v1485
        %v1508 = vpop.f32.mrf.mxu0
        %v1509 = vadd.f32 0.0, %v1508
        %v1510 = vpop.f32.mrf.mxu0
        %v1511 = vadd.f32 0.0, %v1510
        %1512 = vmatmul.bf16.gmra.mxu0 %v1488
        %v1513 = vpop.f32.mrf.mxu0
        %v1514 = vadd.f32 0.0, %v1513
        %v1515 = vpop.f32.mrf.mxu0
        %v1516 = vadd.f32 0.0, %v1515
        %1517 = vmatmul.bf16.gmra.mxu0 %v1491
        %v1518 = vpop.f32.mrf.mxu0
        %v1519 = vadd.f32 0.0, %v1518
        %v1520 = vpop.f32.mrf.mxu0
        %v1521 = vadd.f32 0.0, %v1520
        %1522 = vmatmul.bf16.gmra.mxu0 %v1494
        %v1523 = vpop.f32.mrf.mxu0
        %v1524 = vadd.f32 0.0, %v1523
        %v1525 = vpop.f32.mrf.mxu0
        %v1526 = vadd.f32 0.0, %v1525
        %1527 = vdwg.mxu0
        %v1528 = vsel %vm1385, %v1509, 0.0
        %v1529 = vsel %vm1385, %v1511, 0.0
        %v1530 = vadd.f32 %v1528, %v1529
        %v1531 = vsel %vm1385, %v1514, 0.0
        %v1532 = vadd.f32 %v1530, %v1531
        %v1533 = vsel %vm1385, %v1516, 0.0
        %v1534 = vadd.f32 %v1532, %v1533
        %v1535 = vsel %vm1385, %v1519, 0.0
        %v1536 = vadd.f32 %v1534, %v1535
        %v1537 = vsel %vm1385, %v1521, 0.0
        %v1538 = vadd.f32 %v1536, %v1537
        %v1539 = vsel %vm1385, %v1524, 0.0
        %v1540 = vadd.f32 %v1538, %v1539
        %v1541 = vsel %vm1385, %v1526, 0.0
        %v1542 = vadd.f32 %v1540, %v1541
        %v1543 = vrot.slane %v1542, 4
        %v1544 = vadd.f32 %v1542, %v1543
        %v1545 = vrot.slane %v1544, 2
        %v1546 = vadd.f32 %v1544, %v1545
        %v1547 = vrot.slane %v1546, 1
        %v1548 = vadd.f32 %v1546, %v1547
        %1549 = vst.msk [vmem:[%s302] sm:$0xff] %vm1385, %v1548
        %v1550 = vmul.f32 %v1509, %v1509
        %v1551 = vmul.f32 %v1511, %v1511
        %v1552 = vmul.f32 %v1514, %v1514
        %v1553 = vmul.f32 %v1516, %v1516
        %v1554 = vmul.f32 %v1519, %v1519
        %v1555 = vmul.f32 %v1521, %v1521
        %v1556 = vmul.f32 %v1524, %v1524
        %v1557 = vmul.f32 %v1526, %v1526
        %v1558 = vsel %vm1385, %v1550, 0.0
        %v1559 = vsel %vm1385, %v1551, 0.0
        %v1560 = vadd.f32 %v1558, %v1559
        %v1561 = vsel %vm1385, %v1552, 0.0
        %v1562 = vadd.f32 %v1560, %v1561
        %v1563 = vsel %vm1385, %v1553, 0.0
        %v1564 = vadd.f32 %v1562, %v1563
        %v1565 = vsel %vm1385, %v1554, 0.0
        %v1566 = vadd.f32 %v1564, %v1565
        %v1567 = vsel %vm1385, %v1555, 0.0
        %v1568 = vadd.f32 %v1566, %v1567
        %v1569 = vsel %vm1385, %v1556, 0.0
        %v1570 = vadd.f32 %v1568, %v1569
        %v1571 = vsel %vm1385, %v1557, 0.0
        %v1572 = vadd.f32 %v1570, %v1571
        %v1573 = vrot.slane %v1572, 4
        %v1574 = vadd.f32 %v1572, %v1573
        %v1575 = vrot.slane %v1574, 2
        %v1576 = vadd.f32 %v1574, %v1575
        %v1577 = vrot.slane %v1576, 1
        %v1578 = vadd.f32 %v1576, %v1577
        %1579 = vst.msk [vmem:[%s309] sm:$0xff] %vm1385, %v1578
        %s1580 = sand.u32 %s104, 1
        %s1581 = scalar_lea.sflag [#allocation3], %s1580
        %s1582 = sand.u32 %s104, 1
        %s1583 = smul.addr %s1582, 32
        %s1584 = scalar_lea.vmem [#allocation2], %s1583
        %s1585 = sand.u32 %s28, 1
        %s1586 = scalar_lea.sflag [#allocation5], %s1585
        %s1587 = sand.u32 %s130, 1
        %s1588 = smul.addr %s1587, 8
        %s1589 = scalar_lea.vmem [#allocation4], %s1588
        %s1590 = sand.u32 %s28, 1
        %s1591 = scalar_lea.sflag [#allocation5], %s1590
        %s1592 = sand.u32 %s156, 1
        %s1593 = smul.addr %s1592, 8
        %s1594 = scalar_lea.vmem [#allocation6], %s1593
        %s1595 = sand.u32 %s28, 1
        %s1596 = scalar_lea.sflag [#allocation8], %s1595
        %s1597 = sand.u32 %s182, 1
        %s1598 = smul.addr %s1597, 8
        %s1599 = scalar_lea.vmem [#allocation7], %s1598
        %s1600 = sand.u32 %s28, 1
        %s1601 = scalar_lea.sflag [#allocation8], %s1600
        %s1602 = sand.u32 %s208, 1
        %s1603 = smul.addr %s1602, 8
        %s1604 = scalar_lea.vmem [#allocation9], %s1603
        // Predicated region
        $region33: #{tpu_custom_call.1} parent=31 // pred_check
          %p1605 = pneg %p114
        $region34: #{tpu_custom_call.1} parent=31 // pred_check_branch
          %1607 = sbr.rel (%p1605) target = $region36
        $region35: #{tpu_custom_call.1} parent=31 // pred_region
          %1609 = vsyncadd %s1581, 0
          %s1610 = smul.addr %s28, 8
          %s1611 = smul.addr %s1610, 4
          %s1612 = scalar_lea.hbm %s3, %s1611
          %s1613 = sshll.u32 %s1584, 4
          %s1614 = int_to_ptr.vmem [resolvable:$true] %s1613
          %s1615 = sshll.u32 %s1612, 4
          %s1616 = int_to_ptr.hbm [resolvable:$true] %s1615
          %1621 = dma.vmem_to_hbm [thread:$0]  %s1614, 512, %s1616, %s1581, 64, 64, 4
        $region36: #{tpu_custom_call.1} parent=31 // pred_fallthru
          _
        // Predicated region
        $region37: #{tpu_custom_call.1} parent=31 // pred_check
          %p1622 = pneg %p140
        $region38: #{tpu_custom_call.1} parent=31 // pred_check_branch
          %1624 = sbr.rel (%p1622) target = $region40
        $region39: #{tpu_custom_call.1} parent=31 // pred_region
          %1626 = vsyncadd %s1586, 0
          %s1627 = smul.addr %s28, 8
          %s1628 = scalar_lea.hbm %s4, %s1627
          %s1630 = sshll.u32 %s1589, 4
          %s1631 = int_to_ptr.vmem [resolvable:$true] %s1630
          %s1632 = sshll.u32 %s1628, 4
          %s1633 = int_to_ptr.hbm [resolvable:$true] %s1632
          %1635 = dma.vmem_to_hbm [thread:$0]  %s1631, 128, %s1633, %s1586
        $region40: #{tpu_custom_call.1} parent=31 // pred_fallthru
          _
        // Predicated region
        $region41: #{tpu_custom_call.1} parent=31 // pred_check
          %p1636 = pneg %p166
        $region42: #{tpu_custom_call.1} parent=31 // pred_check_branch
          %1638 = sbr.rel (%p1636) target = $region44
        $region43: #{tpu_custom_call.1} parent=31 // pred_region
          %1640 = vsyncadd %s1591, 0
          %s1641 = smul.addr %s28, 8
          %s1642 = scalar_lea.hbm %s5, %s1641
          %s1644 = sshll.u32 %s1594, 4
          %s1645 = int_to_ptr.vmem [resolvable:$true] %s1644
          %s1646 = sshll.u32 %s1642, 4
          %s1647 = int_to_ptr.hbm [resolvable:$true] %s1646
          %1649 = dma.vmem_to_hbm [thread:$0]  %s1645, 128, %s1647, %s1591
        $region44: #{tpu_custom_call.1} parent=31 // pred_fallthru
          _
        // Predicated region
        $region45: #{tpu_custom_call.1} parent=31 // pred_check
          %p1650 = pneg %p192
        $region46: #{tpu_custom_call.1} parent=31 // pred_check_branch
          %1652 = sbr.rel (%p1650) target = $region48
        $region47: #{tpu_custom_call.1} parent=31 // pred_region
          %1654 = vsyncadd %s1596, 0
          %s1655 = smul.addr %s28, 8
          %s1656 = scalar_lea.hbm %s6, %s1655
          %s1658 = sshll.u32 %s1599, 4
          %s1659 = int_to_ptr.vmem [resolvable:$true] %s1658
          %s1660 = sshll.u32 %s1656, 4
          %s1661 = int_to_ptr.hbm [resolvable:$true] %s1660
          %1663 = dma.vmem_to_hbm [thread:$0]  %s1659, 128, %s1661, %s1596
        $region48: #{tpu_custom_call.1} parent=31 // pred_fallthru
          _
        // Predicated region
        $region49: #{tpu_custom_call.1} parent=31 // pred_check
          %p1664 = pneg %p218
        $region50: #{tpu_custom_call.1} parent=31 // pred_check_branch
          %1666 = sbr.rel (%p1664) target = $region52
        $region51: #{tpu_custom_call.1} parent=31 // pred_region
          %1668 = vsyncadd %s1601, 0
          %s1669 = smul.addr %s28, 8
          %s1670 = scalar_lea.hbm %s7, %s1669
          %s1672 = sshll.u32 %s1604, 4
          %s1673 = int_to_ptr.vmem [resolvable:$true] %s1672
          %s1674 = sshll.u32 %s1670, 4
          %s1675 = int_to_ptr.hbm [resolvable:$true] %s1674
          %1677 = dma.vmem_to_hbm [thread:$0]  %s1673, 128, %s1675, %s1601
        $region52: #{tpu_custom_call.1} parent=31 // pred_fallthru
          _
      $region32: #{tpu_custom_call.1} parent=5 // pred_fallthru
        _
      %p1678 = scmp.le.s32.totalorder 2, %s23
      // Predicated region
      $region53: #{tpu_custom_call.1} parent=5 // pred_check
        %p1679 = pneg %p1678
      $region54: #{tpu_custom_call.1} parent=5 // pred_check_branch
        %1681 = sbr.rel (%p1679) target = $region56
      $region55: #{tpu_custom_call.1} parent=5 // pred_region
        %s1682 = ssub.s32 %s23, 2
        // Predicated region
        $region57: #{tpu_custom_call.1} parent=55 // pred_check
          %p1683 = pneg %p120
        $region58: #{tpu_custom_call.1} parent=55 // pred_check_branch
          %1685 = sbr.rel (%p1683) target = $region60
        $region59: #{tpu_custom_call.1} parent=55 // pred_region
          %s1686 = sand.u32 %s105, 1
          %s1687 = scalar_lea.sflag [#allocation3], %s1686
          %s1688 = sand.u32 %s105, 1
          %s1689 = smul.addr %s1688, 32
          %s1690 = scalar_lea.vmem [#allocation2], %s1689
          %1692 = dma.done %s1687, 512
        $region60: #{tpu_custom_call.1} parent=55 // pred_fallthru
          _
        // Predicated region
        $region61: #{tpu_custom_call.1} parent=55 // pred_check
          %p1693 = pneg %p146
        $region62: #{tpu_custom_call.1} parent=55 // pred_check_branch
          %1695 = sbr.rel (%p1693) target = $region64
        $region63: #{tpu_custom_call.1} parent=55 // pred_region
          %s1696 = sand.u32 %s29, 1
          %s1697 = scalar_lea.sflag [#allocation5], %s1696
          %s1698 = sand.u32 %s131, 1
          %s1699 = smul.addr %s1698, 8
          %s1700 = scalar_lea.vmem [#allocation4], %s1699
          %1702 = dma.done %s1697, 128
        $region64: #{tpu_custom_call.1} parent=55 // pred_fallthru
          _
        // Predicated region
        $region65: #{tpu_custom_call.1} parent=55 // pred_check
          %p1703 = pneg %p172
        $region66: #{tpu_custom_call.1} parent=55 // pred_check_branch
          %1705 = sbr.rel (%p1703) target = $region68
        $region67: #{tpu_custom_call.1} parent=55 // pred_region
          %s1706 = sand.u32 %s29, 1
          %s1707 = scalar_lea.sflag [#allocation5], %s1706
          %s1708 = sand.u32 %s157, 1
          %s1709 = smul.addr %s1708, 8
          %s1710 = scalar_lea.vmem [#allocation6], %s1709
          %1712 = dma.done %s1707, 128
        $region68: #{tpu_custom_call.1} parent=55 // pred_fallthru
          _
        // Predicated region
        $region69: #{tpu_custom_call.1} parent=55 // pred_check
          %p1713 = pneg %p198
        $region70: #{tpu_custom_call.1} parent=55 // pred_check_branch
          %1715 = sbr.rel (%p1713) target = $region72
        $region71: #{tpu_custom_call.1} parent=55 // pred_region
          %s1716 = sand.u32 %s29, 1
          %s1717 = scalar_lea.sflag [#allocation8], %s1716
          %s1718 = sand.u32 %s183, 1
          %s1719 = smul.addr %s1718, 8
          %s1720 = scalar_lea.vmem [#allocation7], %s1719
          %1722 = dma.done %s1717, 128
        $region72: #{tpu_custom_call.1} parent=55 // pred_fallthru
          _
        // Predicated region
        $region73: #{tpu_custom_call.1} parent=55 // pred_check
          %p1723 = pneg %p224
        $region74: #{tpu_custom_call.1} parent=55 // pred_check_branch
          %1725 = sbr.rel (%p1723) target = $region76
        $region75: #{tpu_custom_call.1} parent=55 // pred_region
          %s1726 = sand.u32 %s29, 1
          %s1727 = scalar_lea.sflag [#allocation8], %s1726
          %s1728 = sand.u32 %s209, 1
          %s1729 = smul.addr %s1728, 8
          %s1730 = scalar_lea.vmem [#allocation9], %s1729
          %1732 = dma.done %s1727, 128
        $region76: #{tpu_custom_call.1} parent=55 // pred_fallthru
          _
      $region56: #{tpu_custom_call.1} parent=5 // pred_fallthru
        _
    $region6: #{tpu_custom_call.1} parent=1 // loop_footer
      %s27 = sadd.s32 1, %s23
    $region7: #{tpu_custom_call.1} parent=1 // loop_footer_branch
      %22 = sbr.rel target = $region3
    $region8: #{tpu_custom_call.1} parent=1 // loop_exit
      _
    %1733 = vsyncpa [#allocation3], 1
    %s1734 = scalar_lea.sflag [#allocation3], 1
    %1735 = vsyncpa %s1734, 1
    %1736 = vsyncpa [#allocation5], 1
    %s1737 = scalar_lea.sflag [#allocation5], 1
    %1738 = vsyncpa %s1737, 1
    %1739 = vsyncpa [#allocation8], 1
    %s1740 = scalar_lea.sflag [#allocation8], 1
    %1741 = vsyncpa %s1740, 1

</llo_original>
